<compile_context>
chip_gen: v7x
topology: tpu7x:2x2x1
jax: 0.10.0
libtpu: 0.0.40
codegen_flags: <defaults>
</compile_context>

<pallas_src>
import jax
import jax.numpy as jnp
from jax import lax
from jax.experimental import pallas as pl
from jax.experimental.pallas import tpu as pltpu


def _round_up(x, m):
    return ((x + m - 1) // m) * m


def neural_ode_kernel(dt_ref, z0_ref, bt_ref, w1_ref, w2_ref, b2_ref,
                      traj_ref, z_ref):
    """One (batch-block, T-chunk) grid step of Euler integration.

    dt_ref   : SMEM (T,)            dt[0] = 0, dt[j] = t[j] - t[j-1]
    z0_ref   : VMEM (Bb, Hp)        initial state block (lane-padded)
    bt_ref   : VMEM (Tc, 1, H2p)    precomputed b1 + t[j-1] (zero pad lanes)
    w1_ref   : VMEM (Hp, H2p)
    w2_ref   : VMEM (H2p, Hp)
    b2_ref   : VMEM (1, Hp)
    traj_ref : VMEM (Tc, Bb, Hp)    output trajectory chunk (streamed to HBM)
    z_ref    : VMEM (Bb, Hp)        carried integration state (scratch)
    """
    ti = pl.program_id(1)
    tc = traj_ref.shape[0]
    bb, hp = z0_ref.shape

    # New batch block starts at T-chunk 0: (re)initialize the carried state.
    @pl.when(ti == 0)
    def _():
        z_ref[...] = z0_ref[...]

    # Hoist weight loads and the b2 broadcast out of the step loop.
    w1 = w1_ref[...]
    w2 = w2_ref[...]
    b2 = jnp.broadcast_to(b2_ref[...], (bb, hp))

    base = ti * tc

    def step(s, z):
        dt = dt_ref[base + s]                       # scalar (SMEM)
        # func(z, t) = tanh(z @ W1 + (b1 + t)) @ W2 + b2    (MXU+VPU+EUP)
        pre = jnp.dot(z, w1, preferred_element_type=jnp.float32) + bt_ref[s]
        h = jnp.tanh(pre)
        f = jnp.dot(h, w2, preferred_element_type=jnp.float32) + b2
        z_new = z + dt * f                          # dt[0]==0 -> traj[0]=z0
        traj_ref[s] = z_new
        return z_new

    # Short static trip count per chunk (Tc <= 8): full unroll is cheap and
    # gives the scheduler the whole step sequence.
    z_final = lax.fori_loop(0, tc, step, z_ref[...], unroll=True)
    z_ref[...] = z_final


def neural_ode_pallas(z0, t, w1, b1, w2, b2):
    T = t.shape[0]
    B, H = z0.shape
    H2 = w1.shape[1]

    LANE = 128
    SUB = 8
    Hp = _round_up(H, LANE)
    H2p = _round_up(H2, LANE)
    Bp = _round_up(B, SUB)

    # ---- layout plumbing (exact: padded rows/lanes are zero) --------------
    z0_p = jnp.zeros((Bp, Hp), jnp.float32).at[:B, :H].set(z0)
    w1_p = jnp.zeros((Hp, H2p), jnp.float32).at[:H, :H2].set(w1)
    w2_p = jnp.zeros((H2p, Hp), jnp.float32).at[:H2, :H].set(w2)
    b2_p = jnp.zeros((1, Hp), jnp.float32).at[:, :H].set(b2)

    # dt_full[0] = 0 makes global step 0 a no-op (traj[0] = z0).
    dt_full = jnp.concatenate(
        [jnp.zeros((1,), jnp.float32), (t[1:] - t[:-1]).astype(jnp.float32)])

    # Precompute b1 + t[j-1] per step, zero in padded lanes. Row 0 is unused
    # (multiplied by dt=0) and stays zero.
    bt_valid = (b1 + t[:-1][:, None, None]).astype(jnp.float32)   # (T-1,1,H2)
    bt_full = jnp.zeros((T, 1, H2p), jnp.float32).at[1:, :, :H2].set(bt_valid)

    # ---- grid sizing -------------------------------------------------------
    # T-chunks stream the trajectory out; batch blocks enable megacore on v7x.
    Tc = 8 if T % 8 == 0 else T
    nT = T // Tc
    if Bp > 128 and Bp % 128 == 0:
        Bb = 128
    else:
        Bb = Bp
    nB = Bp // Bb

    traj_p = pl.pallas_call(
        neural_ode_kernel,
        out_shape=jax.ShapeDtypeStruct((T, Bp, Hp), jnp.float32),
        grid_spec=pltpu.PrefetchScalarGridSpec(
            num_scalar_prefetch=0,
            grid=(nB, nT),
            in_specs=[
                # dt: full array resident in SMEM, indexed with global step.
                pl.BlockSpec(memory_space=pltpu.MemorySpace.SMEM),
                # z0: one batch block, constant across T-chunks.
                pl.BlockSpec((Bb, Hp), lambda b, ti: (b, 0)),
                # bt: per-T-chunk slab of precomputed b1 + t.
                pl.BlockSpec((Tc, 1, H2p), lambda b, ti: (ti, 0, 0)),
                # weights / bias: whole array, fetched once (constant index).
                pl.BlockSpec((Hp, H2p), lambda b, ti: (0, 0)),
                pl.BlockSpec((H2p, Hp), lambda b, ti: (0, 0)),
                pl.BlockSpec((1, Hp), lambda b, ti: (0, 0)),
            ],
            out_specs=pl.BlockSpec((Tc, Bb, Hp), lambda b, ti: (ti, b, 0)),
            scratch_shapes=[pltpu.VMEM((Bb, Hp), jnp.float32)],  # carried z
        ),
        compiler_params=pltpu.CompilerParams(
            dimension_semantics=("parallel", "arbitrary"),
            # Streaming keeps the footprint tiny; 32 MiB is safe on every
            # generation (v7x: 64 MiB physical).
            vmem_limit_bytes=32 * 1024 * 1024,
        ),
    )(dt_full, z0_p, bt_full, w1_p, w2_p, b2_p)

    # Strip layout padding (wrapper-side plumbing only).
    return traj_p[:, :B, :H]


def neural_ode_reference(z0, t, w1, b1, w2, b2):
    """Pure-JAX reference mirroring the PyTorch forward exactly."""
    trajectory = [z0]
    z = z0
    for i in range(t.shape[0] - 1):
        dt = t[i + 1] - t[i]
        f = jnp.tanh(z @ w1 + b1 + t[i]) @ w2 + b2
        z = z + dt * f
        trajectory.append(z)
    return jnp.stack(trajectory)


if __name__ == "__main__":
    B, H, H2, T = 8, 32, 64, 16

    key = jax.random.PRNGKey(0)
    k_z0, k_w1, k_b1, k_w2, k_b2 = jax.random.split(key, 5)

    z0 = jax.random.normal(k_z0, (B, H), dtype=jnp.float32)
    t = jnp.linspace(0.0, 1.0, T, dtype=jnp.float32)

    # Deterministic "func" parameters (2-layer MLP dynamics).
    w1 = jax.random.normal(k_w1, (H, H2), dtype=jnp.float32) * 0.1
    b1 = jax.random.normal(k_b1, (1, H2), dtype=jnp.float32) * 0.1
    w2 = jax.random.normal(k_w2, (H2, H), dtype=jnp.float32) * 0.1
    b2 = jax.random.normal(k_b2, (1, H), dtype=jnp.float32) * 0.1

    traj = neural_ode_pallas(z0, t, w1, b1, w2, b2)
    traj = jax.block_until_ready(traj)

    ref = neural_ode_reference(z0, t, w1, b1, w2, b2)
    assert traj.shape == (T, B, H), traj.shape
    assert jnp.allclose(traj, ref, atol=5e-5, rtol=5e-5), "mismatch vs reference"

    print("KERNEL_OK")
</pallas_src>

<mosaic_0001>
module attributes {stable_mosaic.version = 11 : i64} {
  func.func @neural_ode_kernel(%arg0: i32, %arg1: i32, %arg2: memref<16xf32, #tpu.memory_space<smem>>, %arg3: memref<8x128xf32, #tpu.memory_space<vmem>>, %arg4: memref<8x1x128xf32, #tpu.memory_space<vmem>>, %arg5: memref<128x128xf32, #tpu.memory_space<vmem>>, %arg6: memref<128x128xf32, #tpu.memory_space<vmem>>, %arg7: memref<1x128xf32, #tpu.memory_space<vmem>>, %arg8: memref<8x8x128xf32, #tpu.memory_space<vmem>>, %arg9: memref<8x128xf32, #tpu.memory_space<vmem>>) attributes {dimension_semantics = [#tpu.dimension_semantics<parallel>, #tpu.dimension_semantics<arbitrary>], iteration_bounds = array<i64: 1, 2>, scalar_prefetch = 0 : i64, scratch_operands = 1 : i64, tpu.core_type = #tpu.core_type<tc>, window_params = [{transform_indices = @transform_0, window_bounds = array<i64: 16>}, {transform_indices = @transform_1, window_bounds = array<i64: 8, 128>}, {transform_indices = @transform_2, window_bounds = array<i64: 8, 1, 128>}, {pipeline_mode = #tpu.pipeline_mode<synchronous>, transform_indices = @transform_3, window_bounds = array<i64: 128, 128>}, {pipeline_mode = #tpu.pipeline_mode<synchronous>, transform_indices = @transform_4, window_bounds = array<i64: 128, 128>}, {pipeline_mode = #tpu.pipeline_mode<synchronous>, transform_indices = @transform_5, window_bounds = array<i64: 1, 128>}, {transform_indices = @transform_6, window_bounds = array<i64: 8, 8, 128>}]} {
    %c0_i32 = arith.constant 0 : i32
    %0 = arith.cmpi eq, %arg1, %c0_i32 : i32
    %1 = arith.extui %0 : i1 to i32
    %c0_i32_0 = arith.constant 0 : i32
    %2 = arith.cmpi ne, %1, %c0_i32_0 : i32
    scf.if %2 {
      %c0_59 = arith.constant 0 : index
      %c0_60 = arith.constant 0 : index
      %163 = vector.load %arg3[%c0_59, %c0_60] : memref<8x128xf32, #tpu.memory_space<vmem>>, vector<8x128xf32>
      %c0_61 = arith.constant 0 : index
      %c0_62 = arith.constant 0 : index
      %164 = vector.load %arg9[%c0_61, %c0_62] : memref<8x128xf32, #tpu.memory_space<vmem>>, vector<8x128xf32>
      tpu.vector_store %arg9[%c0_61, %c0_62], %163 {strides = array<i32>} : memref<8x128xf32, #tpu.memory_space<vmem>>, vector<8x128xf32>,
    } else {
    }
    %c0 = arith.constant 0 : index
    %c0_1 = arith.constant 0 : index
    %3 = vector.load %arg5[%c0, %c0_1] : memref<128x128xf32, #tpu.memory_space<vmem>>, vector<128x128xf32>
    %c0_2 = arith.constant 0 : index
    %c0_3 = arith.constant 0 : index
    %4 = vector.load %arg6[%c0_2, %c0_3] : memref<128x128xf32, #tpu.memory_space<vmem>>, vector<128x128xf32>
    %c0_4 = arith.constant 0 : index
    %c0_5 = arith.constant 0 : index
    %5 = vector.load %arg7[%c0_4, %c0_5] : memref<1x128xf32, #tpu.memory_space<vmem>>, vector<1x128xf32>
    %6 = vector.shape_cast %5 : vector<1x128xf32> to vector<1x128xf32>
    %7 = vector.broadcast %6 : vector<1x128xf32> to vector<8x128xf32>
    %c8_i32 = arith.constant 8 : i32
    %8 = arith.muli %arg1, %c8_i32 : i32
    %c0_6 = arith.constant 0 : index
    %c0_7 = arith.constant 0 : index
    %9 = vector.load %arg9[%c0_6, %c0_7] : memref<8x128xf32, #tpu.memory_space<vmem>>, vector<8x128xf32>
    %c0_i32_8 = arith.constant 0 : i32
    %10 = arith.addi %8, %c0_i32_8 : i32
    %11 = arith.index_cast %10 : i32 to index
    %12 = memref.load %arg2[%11] : memref<16xf32, #tpu.memory_space<smem>>
    %cst = arith.constant dense<0.000000e+00> : vector<8x128xf32>
    %13 = tpu.matmul %9, %3, %cst {dimension_numbers = #tpu.dot_dimension_numbers<[1], [0], [0], [1], [0, 0, 1, 1], [], []>} : vector<8x128xf32>, vector<128x128xf32>, vector<8x128xf32> -> vector<8x128xf32>
    %14 = arith.index_cast %c0_i32_8 : i32 to index
    %c0_9 = arith.constant 0 : index
    %c0_10 = arith.constant 0 : index
    %15 = vector.load %arg4[%14, %c0_9, %c0_10] : memref<8x1x128xf32, #tpu.memory_space<vmem>>, vector<1x1x128xf32>
    %16 = vector.shape_cast %15 : vector<1x1x128xf32> to vector<1x128xf32>
    %17 = vector.broadcast %16 : vector<1x128xf32> to vector<8x128xf32>
    %18 = arith.addf %13, %17 : vector<8x128xf32>
    %19 = math.tanh %18 : vector<8x128xf32>
    %cst_11 = arith.constant dense<0.000000e+00> : vector<8x128xf32>
    %20 = tpu.matmul %19, %4, %cst_11 {dimension_numbers = #tpu.dot_dimension_numbers<[1], [0], [0], [1], [0, 0, 1, 1], [], []>} : vector<8x128xf32>, vector<128x128xf32>, vector<8x128xf32> -> vector<8x128xf32>
    %21 = arith.addf %20, %7 : vector<8x128xf32>
    %22 = vector.broadcast %12 : f32 to vector<8x128xf32>
    %23 = arith.mulf %22, %21 : vector<8x128xf32>
    %24 = arith.addf %9, %23 : vector<8x128xf32>
    %25 = arith.index_cast %c0_i32_8 : i32 to index
    %c0_12 = arith.constant 0 : index
    %c0_13 = arith.constant 0 : index
    %26 = vector.load %arg8[%25, %c0_12, %c0_13] : memref<8x8x128xf32, #tpu.memory_space<vmem>>, vector<1x8x128xf32>
    %27 = vector.shape_cast %26 : vector<1x8x128xf32> to vector<8x128xf32>
    %28 = vector.shape_cast %24 : vector<8x128xf32> to vector<1x8x128xf32>
    tpu.vector_store %arg8[%25, %c0_12, %c0_13], %28 {strides = array<i32>} : memref<8x8x128xf32, #tpu.memory_space<vmem>>, vector<1x8x128xf32>,
    %c1_i32 = arith.constant 1 : i32
    %29 = arith.addi %8, %c1_i32 : i32
    %30 = arith.index_cast %29 : i32 to index
    %31 = memref.load %arg2[%30] : memref<16xf32, #tpu.memory_space<smem>>
    %cst_14 = arith.constant dense<0.000000e+00> : vector<8x128xf32>
    %32 = tpu.matmul %24, %3, %cst_14 {dimension_numbers = #tpu.dot_dimension_numbers<[1], [0], [0], [1], [0, 0, 1, 1], [], []>} : vector<8x128xf32>, vector<128x128xf32>, vector<8x128xf32> -> vector<8x128xf32>
    %33 = arith.index_cast %c1_i32 : i32 to index
    %c0_15 = arith.constant 0 : index
    %c0_16 = arith.constant 0 : index
    %34 = vector.load %arg4[%33, %c0_15, %c0_16] : memref<8x1x128xf32, #tpu.memory_space<vmem>>, vector<1x1x128xf32>
    %35 = vector.shape_cast %34 : vector<1x1x128xf32> to vector<1x128xf32>
    %36 = vector.broadcast %35 : vector<1x128xf32> to vector<8x128xf32>
    %37 = arith.addf %32, %36 : vector<8x128xf32>
    %38 = math.tanh %37 : vector<8x128xf32>
    %cst_17 = arith.constant dense<0.000000e+00> : vector<8x128xf32>
    %39 = tpu.matmul %38, %4, %cst_17 {dimension_numbers = #tpu.dot_dimension_numbers<[1], [0], [0], [1], [0, 0, 1, 1], [], []>} : vector<8x128xf32>, vector<128x128xf32>, vector<8x128xf32> -> vector<8x128xf32>
    %40 = arith.addf %39, %7 : vector<8x128xf32>
    %41 = vector.broadcast %31 : f32 to vector<8x128xf32>
    %42 = arith.mulf %41, %40 : vector<8x128xf32>
    %43 = arith.addf %24, %42 : vector<8x128xf32>
    %44 = arith.index_cast %c1_i32 : i32 to index
    %c0_18 = arith.constant 0 : index
    %c0_19 = arith.constant 0 : index
    %45 = vector.load %arg8[%44, %c0_18, %c0_19] : memref<8x8x128xf32, #tpu.memory_space<vmem>>, vector<1x8x128xf32>
    %46 = vector.shape_cast %45 : vector<1x8x128xf32> to vector<8x128xf32>
    %47 = vector.shape_cast %43 : vector<8x128xf32> to vector<1x8x128xf32>
    tpu.vector_store %arg8[%44, %c0_18, %c0_19], %47 {strides = array<i32>} : memref<8x8x128xf32, #tpu.memory_space<vmem>>, vector<1x8x128xf32>,
    %c2_i32 = arith.constant 2 : i32
    %48 = arith.addi %8, %c2_i32 : i32
    %49 = arith.index_cast %48 : i32 to index
    %50 = memref.load %arg2[%49] : memref<16xf32, #tpu.memory_space<smem>>
    %cst_20 = arith.constant dense<0.000000e+00> : vector<8x128xf32>
    %51 = tpu.matmul %43, %3, %cst_20 {dimension_numbers = #tpu.dot_dimension_numbers<[1], [0], [0], [1], [0, 0, 1, 1], [], []>} : vector<8x128xf32>, vector<128x128xf32>, vector<8x128xf32> -> vector<8x128xf32>
    %52 = arith.index_cast %c2_i32 : i32 to index
    %c0_21 = arith.constant 0 : index
    %c0_22 = arith.constant 0 : index
    %53 = vector.load %arg4[%52, %c0_21, %c0_22] : memref<8x1x128xf32, #tpu.memory_space<vmem>>, vector<1x1x128xf32>
    %54 = vector.shape_cast %53 : vector<1x1x128xf32> to vector<1x128xf32>
    %55 = vector.broadcast %54 : vector<1x128xf32> to vector<8x128xf32>
    %56 = arith.addf %51, %55 : vector<8x128xf32>
    %57 = math.tanh %56 : vector<8x128xf32>
    %cst_23 = arith.constant dense<0.000000e+00> : vector<8x128xf32>
    %58 = tpu.matmul %57, %4, %cst_23 {dimension_numbers = #tpu.dot_dimension_numbers<[1], [0], [0], [1], [0, 0, 1, 1], [], []>} : vector<8x128xf32>, vector<128x128xf32>, vector<8x128xf32> -> vector<8x128xf32>
    %59 = arith.addf %58, %7 : vector<8x128xf32>
    %60 = vector.broadcast %50 : f32 to vector<8x128xf32>
    %61 = arith.mulf %60, %59 : vector<8x128xf32>
    %62 = arith.addf %43, %61 : vector<8x128xf32>
    %63 = arith.index_cast %c2_i32 : i32 to index
    %c0_24 = arith.constant 0 : index
    %c0_25 = arith.constant 0 : index
    %64 = vector.load %arg8[%63, %c0_24, %c0_25] : memref<8x8x128xf32, #tpu.memory_space<vmem>>, vector<1x8x128xf32>
    %65 = vector.shape_cast %64 : vector<1x8x128xf32> to vector<8x128xf32>
    %66 = vector.shape_cast %62 : vector<8x128xf32> to vector<1x8x128xf32>
    tpu.vector_store %arg8[%63, %c0_24, %c0_25], %66 {strides = array<i32>} : memref<8x8x128xf32, #tpu.memory_space<vmem>>, vector<1x8x128xf32>,
    %c3_i32 = arith.constant 3 : i32
    %67 = arith.addi %8, %c3_i32 : i32
    %68 = arith.index_cast %67 : i32 to index
    %69 = memref.load %arg2[%68] : memref<16xf32, #tpu.memory_space<smem>>
    %cst_26 = arith.constant dense<0.000000e+00> : vector<8x128xf32>
    %70 = tpu.matmul %62, %3, %cst_26 {dimension_numbers = #tpu.dot_dimension_numbers<[1], [0], [0], [1], [0, 0, 1, 1], [], []>} : vector<8x128xf32>, vector<128x128xf32>, vector<8x128xf32> -> vector<8x128xf32>
    %71 = arith.index_cast %c3_i32 : i32 to index
    %c0_27 = arith.constant 0 : index
    %c0_28 = arith.constant 0 : index
    %72 = vector.load %arg4[%71, %c0_27, %c0_28] : memref<8x1x128xf32, #tpu.memory_space<vmem>>, vector<1x1x128xf32>
    %73 = vector.shape_cast %72 : vector<1x1x128xf32> to vector<1x128xf32>
    %74 = vector.broadcast %73 : vector<1x128xf32> to vector<8x128xf32>
    %75 = arith.addf %70, %74 : vector<8x128xf32>
    %76 = math.tanh %75 : vector<8x128xf32>
    %cst_29 = arith.constant dense<0.000000e+00> : vector<8x128xf32>
    %77 = tpu.matmul %76, %4, %cst_29 {dimension_numbers = #tpu.dot_dimension_numbers<[1], [0], [0], [1], [0, 0, 1, 1], [], []>} : vector<8x128xf32>, vector<128x128xf32>, vector<8x128xf32> -> vector<8x128xf32>
    %78 = arith.addf %77, %7 : vector<8x128xf32>
    %79 = vector.broadcast %69 : f32 to vector<8x128xf32>
    %80 = arith.mulf %79, %78 : vector<8x128xf32>
    %81 = arith.addf %62, %80 : vector<8x128xf32>
    %82 = arith.index_cast %c3_i32 : i32 to index
    %c0_30 = arith.constant 0 : index
    %c0_31 = arith.constant 0 : index
    %83 = vector.load %arg8[%82, %c0_30, %c0_31] : memref<8x8x128xf32, #tpu.memory_space<vmem>>, vector<1x8x128xf32>
    %84 = vector.shape_cast %83 : vector<1x8x128xf32> to vector<8x128xf32>
    %85 = vector.shape_cast %81 : vector<8x128xf32> to vector<1x8x128xf32>
    tpu.vector_store %arg8[%82, %c0_30, %c0_31], %85 {strides = array<i32>} : memref<8x8x128xf32, #tpu.memory_space<vmem>>, vector<1x8x128xf32>,
    %c4_i32 = arith.constant 4 : i32
    %86 = arith.addi %8, %c4_i32 : i32
    %87 = arith.index_cast %86 : i32 to index
    %88 = memref.load %arg2[%87] : memref<16xf32, #tpu.memory_space<smem>>
    %cst_32 = arith.constant dense<0.000000e+00> : vector<8x128xf32>
    %89 = tpu.matmul %81, %3, %cst_32 {dimension_numbers = #tpu.dot_dimension_numbers<[1], [0], [0], [1], [0, 0, 1, 1], [], []>} : vector<8x128xf32>, vector<128x128xf32>, vector<8x128xf32> -> vector<8x128xf32>
    %90 = arith.index_cast %c4_i32 : i32 to index
    %c0_33 = arith.constant 0 : index
    %c0_34 = arith.constant 0 : index
    %91 = vector.load %arg4[%90, %c0_33, %c0_34] : memref<8x1x128xf32, #tpu.memory_space<vmem>>, vector<1x1x128xf32>
    %92 = vector.shape_cast %91 : vector<1x1x128xf32> to vector<1x128xf32>
    %93 = vector.broadcast %92 : vector<1x128xf32> to vector<8x128xf32>
    %94 = arith.addf %89, %93 : vector<8x128xf32>
    %95 = math.tanh %94 : vector<8x128xf32>
    %cst_35 = arith.constant dense<0.000000e+00> : vector<8x128xf32>
    %96 = tpu.matmul %95, %4, %cst_35 {dimension_numbers = #tpu.dot_dimension_numbers<[1], [0], [0], [1], [0, 0, 1, 1], [], []>} : vector<8x128xf32>, vector<128x128xf32>, vector<8x128xf32> -> vector<8x128xf32>
    %97 = arith.addf %96, %7 : vector<8x128xf32>
    %98 = vector.broadcast %88 : f32 to vector<8x128xf32>
    %99 = arith.mulf %98, %97 : vector<8x128xf32>
    %100 = arith.addf %81, %99 : vector<8x128xf32>
    %101 = arith.index_cast %c4_i32 : i32 to index
    %c0_36 = arith.constant 0 : index
    %c0_37 = arith.constant 0 : index
    %102 = vector.load %arg8[%101, %c0_36, %c0_37] : memref<8x8x128xf32, #tpu.memory_space<vmem>>, vector<1x8x128xf32>
    %103 = vector.shape_cast %102 : vector<1x8x128xf32> to vector<8x128xf32>
    %104 = vector.shape_cast %100 : vector<8x128xf32> to vector<1x8x128xf32>
    tpu.vector_store %arg8[%101, %c0_36, %c0_37], %104 {strides = array<i32>} : memref<8x8x128xf32, #tpu.memory_space<vmem>>, vector<1x8x128xf32>,
    %c5_i32 = arith.constant 5 : i32
    %105 = arith.addi %8, %c5_i32 : i32
    %106 = arith.index_cast %105 : i32 to index
    %107 = memref.load %arg2[%106] : memref<16xf32, #tpu.memory_space<smem>>
    %cst_38 = arith.constant dense<0.000000e+00> : vector<8x128xf32>
    %108 = tpu.matmul %100, %3, %cst_38 {dimension_numbers = #tpu.dot_dimension_numbers<[1], [0], [0], [1], [0, 0, 1, 1], [], []>} : vector<8x128xf32>, vector<128x128xf32>, vector<8x128xf32> -> vector<8x128xf32>
    %109 = arith.index_cast %c5_i32 : i32 to index
    %c0_39 = arith.constant 0 : index
    %c0_40 = arith.constant 0 : index
    %110 = vector.load %arg4[%109, %c0_39, %c0_40] : memref<8x1x128xf32, #tpu.memory_space<vmem>>, vector<1x1x128xf32>
    %111 = vector.shape_cast %110 : vector<1x1x128xf32> to vector<1x128xf32>
    %112 = vector.broadcast %111 : vector<1x128xf32> to vector<8x128xf32>
    %113 = arith.addf %108, %112 : vector<8x128xf32>
    %114 = math.tanh %113 : vector<8x128xf32>
    %cst_41 = arith.constant dense<0.000000e+00> : vector<8x128xf32>
    %115 = tpu.matmul %114, %4, %cst_41 {dimension_numbers = #tpu.dot_dimension_numbers<[1], [0], [0], [1], [0, 0, 1, 1], [], []>} : vector<8x128xf32>, vector<128x128xf32>, vector<8x128xf32> -> vector<8x128xf32>
    %116 = arith.addf %115, %7 : vector<8x128xf32>
    %117 = vector.broadcast %107 : f32 to vector<8x128xf32>
    %118 = arith.mulf %117, %116 : vector<8x128xf32>
    %119 = arith.addf %100, %118 : vector<8x128xf32>
    %120 = arith.index_cast %c5_i32 : i32 to index
    %c0_42 = arith.constant 0 : index
    %c0_43 = arith.constant 0 : index
    %121 = vector.load %arg8[%120, %c0_42, %c0_43] : memref<8x8x128xf32, #tpu.memory_space<vmem>>, vector<1x8x128xf32>
    %122 = vector.shape_cast %121 : vector<1x8x128xf32> to vector<8x128xf32>
    %123 = vector.shape_cast %119 : vector<8x128xf32> to vector<1x8x128xf32>
    tpu.vector_store %arg8[%120, %c0_42, %c0_43], %123 {strides = array<i32>} : memref<8x8x128xf32, #tpu.memory_space<vmem>>, vector<1x8x128xf32>,
    %c6_i32 = arith.constant 6 : i32
    %124 = arith.addi %8, %c6_i32 : i32
    %125 = arith.index_cast %124 : i32 to index
    %126 = memref.load %arg2[%125] : memref<16xf32, #tpu.memory_space<smem>>
    %cst_44 = arith.constant dense<0.000000e+00> : vector<8x128xf32>
    %127 = tpu.matmul %119, %3, %cst_44 {dimension_numbers = #tpu.dot_dimension_numbers<[1], [0], [0], [1], [0, 0, 1, 1], [], []>} : vector<8x128xf32>, vector<128x128xf32>, vector<8x128xf32> -> vector<8x128xf32>
    %128 = arith.index_cast %c6_i32 : i32 to index
    %c0_45 = arith.constant 0 : index
    %c0_46 = arith.constant 0 : index
    %129 = vector.load %arg4[%128, %c0_45, %c0_46] : memref<8x1x128xf32, #tpu.memory_space<vmem>>, vector<1x1x128xf32>
    %130 = vector.shape_cast %129 : vector<1x1x128xf32> to vector<1x128xf32>
    %131 = vector.broadcast %130 : vector<1x128xf32> to vector<8x128xf32>
    %132 = arith.addf %127, %131 : vector<8x128xf32>
    %133 = math.tanh %132 : vector<8x128xf32>
    %cst_47 = arith.constant dense<0.000000e+00> : vector<8x128xf32>
    %134 = tpu.matmul %133, %4, %cst_47 {dimension_numbers = #tpu.dot_dimension_numbers<[1], [0], [0], [1], [0, 0, 1, 1], [], []>} : vector<8x128xf32>, vector<128x128xf32>, vector<8x128xf32> -> vector<8x128xf32>
    %135 = arith.addf %134, %7 : vector<8x128xf32>
    %136 = vector.broadcast %126 : f32 to vector<8x128xf32>
    %137 = arith.mulf %136, %135 : vector<8x128xf32>
    %138 = arith.addf %119, %137 : vector<8x128xf32>
    %139 = arith.index_cast %c6_i32 : i32 to index
    %c0_48 = arith.constant 0 : index
    %c0_49 = arith.constant 0 : index
    %140 = vector.load %arg8[%139, %c0_48, %c0_49] : memref<8x8x128xf32, #tpu.memory_space<vmem>>, vector<1x8x128xf32>
    %141 = vector.shape_cast %140 : vector<1x8x128xf32> to vector<8x128xf32>
    %142 = vector.shape_cast %138 : vector<8x128xf32> to vector<1x8x128xf32>
    tpu.vector_store %arg8[%139, %c0_48, %c0_49], %142 {strides = array<i32>} : memref<8x8x128xf32, #tpu.memory_space<vmem>>, vector<1x8x128xf32>,
    %c7_i32 = arith.constant 7 : i32
    %143 = arith.addi %8, %c7_i32 : i32
    %144 = arith.index_cast %143 : i32 to index
    %145 = memref.load %arg2[%144] : memref<16xf32, #tpu.memory_space<smem>>
    %cst_50 = arith.constant dense<0.000000e+00> : vector<8x128xf32>
    %146 = tpu.matmul %138, %3, %cst_50 {dimension_numbers = #tpu.dot_dimension_numbers<[1], [0], [0], [1], [0, 0, 1, 1], [], []>} : vector<8x128xf32>, vector<128x128xf32>, vector<8x128xf32> -> vector<8x128xf32>
    %147 = arith.index_cast %c7_i32 : i32 to index
    %c0_51 = arith.constant 0 : index
    %c0_52 = arith.constant 0 : index
    %148 = vector.load %arg4[%147, %c0_51, %c0_52] : memref<8x1x128xf32, #tpu.memory_space<vmem>>, vector<1x1x128xf32>
    %149 = vector.shape_cast %148 : vector<1x1x128xf32> to vector<1x128xf32>
    %150 = vector.broadcast %149 : vector<1x128xf32> to vector<8x128xf32>
    %151 = arith.addf %146, %150 : vector<8x128xf32>
    %152 = math.tanh %151 : vector<8x128xf32>
    %cst_53 = arith.constant dense<0.000000e+00> : vector<8x128xf32>
    %153 = tpu.matmul %152, %4, %cst_53 {dimension_numbers = #tpu.dot_dimension_numbers<[1], [0], [0], [1], [0, 0, 1, 1], [], []>} : vector<8x128xf32>, vector<128x128xf32>, vector<8x128xf32> -> vector<8x128xf32>
    %154 = arith.addf %153, %7 : vector<8x128xf32>
    %155 = vector.broadcast %145 : f32 to vector<8x128xf32>
    %156 = arith.mulf %155, %154 : vector<8x128xf32>
    %157 = arith.addf %138, %156 : vector<8x128xf32>
    %158 = arith.index_cast %c7_i32 : i32 to index
    %c0_54 = arith.constant 0 : index
    %c0_55 = arith.constant 0 : index
    %159 = vector.load %arg8[%158, %c0_54, %c0_55] : memref<8x8x128xf32, #tpu.memory_space<vmem>>, vector<1x8x128xf32>
    %160 = vector.shape_cast %159 : vector<1x8x128xf32> to vector<8x128xf32>
    %161 = vector.shape_cast %157 : vector<8x128xf32> to vector<1x8x128xf32>
    tpu.vector_store %arg8[%158, %c0_54, %c0_55], %161 {strides = array<i32>} : memref<8x8x128xf32, #tpu.memory_space<vmem>>, vector<1x8x128xf32>,
    %c8_i32_56 = arith.constant 8 : i32
    %c0_57 = arith.constant 0 : index
    %c0_58 = arith.constant 0 : index
    %162 = vector.load %arg9[%c0_57, %c0_58] : memref<8x128xf32, #tpu.memory_space<vmem>>, vector<8x128xf32>
    tpu.vector_store %arg9[%c0_57, %c0_58], %157 {strides = array<i32>} : memref<8x128xf32, #tpu.memory_space<vmem>>, vector<8x128xf32>,
    return
  }
  func.func @transform_0(%arg0: i32, %arg1: i32) -> i32 {
    %c0_i32 = arith.constant 0 : i32
    %c0_i32_0 = arith.constant 0 : i32
    return %c0_i32 : i32
  }
  func.func @transform_1(%arg0: i32, %arg1: i32) -> (i32, i32) {
    %c0_i32 = arith.constant 0 : i32
    %c0_i32_0 = arith.constant 0 : i32
    return %arg0, %c0_i32 : i32, i32
  }
  func.func @transform_2(%arg0: i32, %arg1: i32) -> (i32, i32, i32) {
    %c0_i32 = arith.constant 0 : i32
    %c0_i32_0 = arith.constant 0 : i32
    %c0_i32_1 = arith.constant 0 : i32
    return %arg1, %c0_i32, %c0_i32_0 : i32, i32, i32
  }
  func.func @transform_3(%arg0: i32, %arg1: i32) -> (i32, i32) {
    %c0_i32 = arith.constant 0 : i32
    %c0_i32_0 = arith.constant 0 : i32
    %c0_i32_1 = arith.constant 0 : i32
    return %c0_i32, %c0_i32_0 : i32, i32
  }
  func.func @transform_4(%arg0: i32, %arg1: i32) -> (i32, i32) {
    %c0_i32 = arith.constant 0 : i32
    %c0_i32_0 = arith.constant 0 : i32
    %c0_i32_1 = arith.constant 0 : i32
    return %c0_i32, %c0_i32_0 : i32, i32
  }
  func.func @transform_5(%arg0: i32, %arg1: i32) -> (i32, i32) {
    %c0_i32 = arith.constant 0 : i32
    %c0_i32_0 = arith.constant 0 : i32
    %c0_i32_1 = arith.constant 0 : i32
    return %c0_i32, %c0_i32_0 : i32, i32
  }
  func.func @transform_6(%arg0: i32, %arg1: i32) -> (i32, i32, i32) {
    %c0_i32 = arith.constant 0 : i32
    %c0_i32_0 = arith.constant 0 : i32
    return %arg1, %arg0, %c0_i32 : i32, i32, i32
  }
}

</mosaic_0001>

<llo_original>
// kernel: tpu_custom_call.1
$region0: #{tpu_custom_call.1}
  #allocation0 [shape = 'u32[]', space=smem, size = 0x4, offset = 0x4, fixed_abs, tag = 'smem constant byte address 0x4 - core index']
  #allocation1 [shape = 'u32[144,128]{1,0:T(1,128)}', space=vmem, size = 0x12000, scoped, tag = 'internal scratch']
  #allocation2 [shape = 'f32[8,128]{1,0:T(8,128)}', space=vmem, size = 0x1000, scoped, tag = 'scratch operand']
  %s0 = inlined_call_operand.hbm [shape: f32[16], index: 0, kind: input, shape index: {}]
  %s1 = inlined_call_operand.hbm [shape: f32[8,128], index: 1, kind: input, shape index: {}]
  %s2 = inlined_call_operand.hbm [shape: f32[16,1,128], index: 2, kind: input, shape index: {}]
  %s3 = inlined_call_operand.hbm [shape: f32[128,128], index: 3, kind: input, shape index: {}]
  %s4 = inlined_call_operand.hbm [shape: f32[128,128], index: 4, kind: input, shape index: {}]
  %s5 = inlined_call_operand.vmem [shape: f32[1,128], index: 5, kind: input, shape index: {}]
  %s6 = inlined_call_operand.hbm [shape: f32[16,8,128], index: 6, kind: output, shape index: {}]
  %s7 = sld [smem:[#allocation0]]
  $region81: #{tpu_custom_call.1} parent=0
    _
  %s9 = ssub.s32 1, %s7
  %s10 = scalar_select 0, %s9, %s7
  $region1: #{tpu_custom_call.1} parent=0
    #allocation3 [shape = 'u8[512]{0}', space=smem, size = 0x200, scoped, tag = 'input window, operand 0, single buffered']
    #allocation4 [shape = 's32[2]{0}', space=sflag, size = 0x8, scoped, tag = 'scoped memory for tpu_custom_call.1']
    #allocation5 [shape = 's32[2]{0}', space=sflag, size = 0x8, scoped, tag = 'scoped memory for tpu_custom_call.1']
    #allocation6 [shape = 's32[2]{0}', space=sflag, size = 0x8, scoped, tag = 'scoped memory for tpu_custom_call.1']
    #allocation7 [shape = 'u8[4096]{0}', space=vmem, size = 0x1000, scoped, tag = 'input window, operand 1, single buffered']
    #allocation8 [shape = 'u8[8192]{0}', space=vmem, size = 0x2000, scoped, tag = 'input window, operand 2']
    #allocation9 [shape = 's32[2]{0}', space=sflag, size = 0x8, scoped, tag = 'scoped memory for tpu_custom_call.1']
    #allocation10 [shape = 'u8[65536]{0}', space=vmem, size = 0x10000, scoped, tag = 'input window, operand 3, single buffered']
    #allocation11 [shape = 'u8[65536]{0}', space=vmem, size = 0x10000, scoped, tag = 'input window, operand 4, single buffered']
    #allocation12 [shape = 's32[1]{0}', space=sflag, size = 0x4, scoped, tag = 'scoped memory for tpu_custom_call.1']
    #allocation13 [shape = 'u8[65536]{0}', space=vmem, size = 0x10000, scoped, tag = 'output window, operand 0']
    %11 = vsyncpa [#allocation6], 0
    %12 = vsyncpa [#allocation4], 0
    %13 = vsyncpa [#allocation9], 0
    %s14 = scalar_lea.sflag [#allocation9], 1
    %15 = vsyncpa %s14, 0
    %16 = vsyncpa [#allocation12], 0
    %17 = vsyncpa [#allocation5], 0
    %s18 = scalar_lea.sflag [#allocation5], 1
    %19 = vsyncpa %s18, 0
    loop: start=0, step=1, limit=4
    $region2: #{tpu_custom_call.1} parent=1 // loop_pre_header
      _
    $region3: #{tpu_custom_call.1} parent=1 // loop_header
      %s21 = sphi 0, %s25
      %p22 = scmp.ge.s32.totalorder %s21, 4
      %s28 = sphi 0, %s40
      %s29 = sphi 0, %s36
      %s30 = sphi 0, %s28
      %s31 = sphi 0, %s29
      %s32 = sphi 0, %s30
      %s33 = sphi 0, %s31
      %s41 = sphi 0, %s41
      %s43 = sphi 0, %s41
      %s44 = sphi 0, %s43
      %s58 = sphi 0, %s44
      %s64 = sphi 0, %s66
      %s67 = sphi 0, %s64
      %s68 = sphi 0, %s67
      %s84 = sphi 0, %s68
      %s90 = sphi 0, %s92
      %s93 = sphi 0, %s90
      %s94 = sphi 0, %s93
      %s110 = sphi 0, %s94
      %s114 = sphi 0, %s114
      %s116 = sphi 0, %s114
      %s117 = sphi 0, %s116
      %s131 = sphi 0, %s117
      %s135 = sphi 0, %s135
      %s137 = sphi 0, %s135
      %s138 = sphi 0, %s137
      %s152 = sphi 0, %s138
      %s156 = sphi 0, %s156
      %s158 = sphi 0, %s156
      %s159 = sphi 0, %s158
      %s173 = sphi 0, %s159
      %s181 = sphi 0, %s183
      %s184 = sphi 0, %s181
      %s185 = sphi 0, %s184
      %s201 = sphi 0, %s185
    $region4: #{tpu_custom_call.1} parent=1 // loop_header_branch
      %24 = sbr.rel (%p22) target = $region8
    $region5: #{tpu_custom_call.1} parent=1 // loop_body
      %s26 = ssub.s32 %s21, 1
      %s27 = ssub.s32 %s21, 2
      %s34 = sadd.s32 1, %s29
      %p35 = scmp.ge.s32.totalorder %s34, 2
      %s36 = scalar_select %p35, 0, %s34
      %s37 = sadd.s32 1, %s28
      %s38 = scalar_select %p35, %s37, %s28
      %p39 = scmp.ge.s32.totalorder %s38, 1
      %s40 = scalar_select %p39, 0, %s38
      %s42 = sadd.s32 %s41, 1
      %p45 = scmp.eq.s32.totalorder %s21, 1
      %p46 = scmp.ne.s32.totalorder %s41, %s43
      %p47 = scmp.eq.s32.totalorder %s21, 0
      %p48 = por %p46, %p47
      %p49 = scmp.ne.s32.totalorder %s41, %s43
      %p50 = scmp.eq.s32.totalorder %s26, 1
      %p51 = por %p49, %p50
      %p52 = scmp.ne.s32.totalorder %s43, %s44
      %p53 = scmp.eq.s32.totalorder %s26, 0
      %p54 = por %p52, %p53
      %p55 = scmp.ne.s32.totalorder %s43, %s44
      %p56 = scmp.eq.s32.totalorder %s27, 1
      %p57 = por %p55, %p56
      %p59 = scmp.ne.s32.totalorder %s44, %s58
      %p60 = scmp.eq.s32.totalorder %s27, 0
      %p61 = por %p59, %p60
      %s62 = ssub.s32 %s28, %s40
      %p63 = scmp.eq.s32.totalorder %s62, 0
      %s65 = sadd.s32 %s64, 1
      %s66 = scalar_select %p63, %s64, %s65
      %p69 = pneg %p63
      %p70 = scmp.eq.s32.totalorder %s21, 1
      %p71 = por %p69, %p70
      %p72 = scmp.ne.s32.totalorder %s64, %s67
      %p73 = scmp.eq.s32.totalorder %s21, 0
      %p74 = por %p72, %p73
      %p75 = scmp.ne.s32.totalorder %s64, %s67
      %p76 = scmp.eq.s32.totalorder %s26, 1
      %p77 = por %p75, %p76
      %p78 = scmp.ne.s32.totalorder %s67, %s68
      %p79 = scmp.eq.s32.totalorder %s26, 0
      %p80 = por %p78, %p79
      %p81 = scmp.ne.s32.totalorder %s67, %s68
      %p82 = scmp.eq.s32.totalorder %s27, 1
      %p83 = por %p81, %p82
      %p85 = scmp.ne.s32.totalorder %s68, %s84
      %p86 = scmp.eq.s32.totalorder %s27, 0
      %p87 = por %p85, %p86
      %s88 = ssub.s32 %s29, %s36
      %p89 = scmp.eq.s32.totalorder %s88, 0
      %s91 = sadd.s32 %s90, 1
      %s92 = scalar_select %p89, %s90, %s91
      %p95 = pneg %p89
      %p96 = scmp.eq.s32.totalorder %s21, 1
      %p97 = por %p95, %p96
      %p98 = scmp.ne.s32.totalorder %s90, %s93
      %p99 = scmp.eq.s32.totalorder %s21, 0
      %p100 = por %p98, %p99
      %p101 = scmp.ne.s32.totalorder %s90, %s93
      %p102 = scmp.eq.s32.totalorder %s26, 1
      %p103 = por %p101, %p102
      %p104 = scmp.ne.s32.totalorder %s93, %s94
      %p105 = scmp.eq.s32.totalorder %s26, 0
      %p106 = por %p104, %p105
      %p107 = scmp.ne.s32.totalorder %s93, %s94
      %p108 = scmp.eq.s32.totalorder %s27, 1
      %p109 = por %p107, %p108
      %p111 = scmp.ne.s32.totalorder %s94, %s110
      %p112 = scmp.eq.s32.totalorder %s27, 0
      %p113 = por %p111, %p112
      %s115 = sadd.s32 %s114, 1
      %p118 = scmp.eq.s32.totalorder %s21, 1
      %p119 = scmp.ne.s32.totalorder %s114, %s116
      %p120 = scmp.eq.s32.totalorder %s21, 0
      %p121 = por %p119, %p120
      %p122 = scmp.ne.s32.totalorder %s114, %s116
      %p123 = scmp.eq.s32.totalorder %s26, 1
      %p124 = por %p122, %p123
      %p125 = scmp.ne.s32.totalorder %s116, %s117
      %p126 = scmp.eq.s32.totalorder %s26, 0
      %p127 = por %p125, %p126
      %p128 = scmp.ne.s32.totalorder %s116, %s117
      %p129 = scmp.eq.s32.totalorder %s27, 1
      %p130 = por %p128, %p129
      %p132 = scmp.ne.s32.totalorder %s117, %s131
      %p133 = scmp.eq.s32.totalorder %s27, 0
      %p134 = por %p132, %p133
      %s136 = sadd.s32 %s135, 1
      %p139 = scmp.eq.s32.totalorder %s21, 1
      %p140 = scmp.ne.s32.totalorder %s135, %s137
      %p141 = scmp.eq.s32.totalorder %s21, 0
      %p142 = por %p140, %p141
      %p143 = scmp.ne.s32.totalorder %s135, %s137
      %p144 = scmp.eq.s32.totalorder %s26, 1
      %p145 = por %p143, %p144
      %p146 = scmp.ne.s32.totalorder %s137, %s138
      %p147 = scmp.eq.s32.totalorder %s26, 0
      %p148 = por %p146, %p147
      %p149 = scmp.ne.s32.totalorder %s137, %s138
      %p150 = scmp.eq.s32.totalorder %s27, 1
      %p151 = por %p149, %p150
      %p153 = scmp.ne.s32.totalorder %s138, %s152
      %p154 = scmp.eq.s32.totalorder %s27, 0
      %p155 = por %p153, %p154
      %s157 = sadd.s32 %s156, 1
      %p160 = scmp.eq.s32.totalorder %s21, 1
      %p161 = scmp.ne.s32.totalorder %s156, %s158
      %p162 = scmp.eq.s32.totalorder %s21, 0
      %p163 = por %p161, %p162
      %p164 = scmp.ne.s32.totalorder %s156, %s158
      %p165 = scmp.eq.s32.totalorder %s26, 1
      %p166 = por %p164, %p165
      %p167 = scmp.ne.s32.totalorder %s158, %s159
      %p168 = scmp.eq.s32.totalorder %s26, 0
      %p169 = por %p167, %p168
      %p170 = scmp.ne.s32.totalorder %s158, %s159
      %p171 = scmp.eq.s32.totalorder %s27, 1
      %p172 = por %p170, %p171
      %p174 = scmp.ne.s32.totalorder %s159, %s173
      %p175 = scmp.eq.s32.totalorder %s27, 0
      %p176 = por %p174, %p175
      %s177 = ssub.s32 %s29, %s36
      %s178 = ssub.s32 %s28, %s40
      %s179 = sor.u32 %s177, %s178
      %p180 = scmp.eq.s32.totalorder %s179, 0
      %s182 = sadd.s32 %s181, 1
      %s183 = scalar_select %p180, %s181, %s182
      %p186 = pneg %p180
      %p187 = scmp.eq.s32.totalorder %s21, 1
      %p188 = por %p186, %p187
      %p189 = scmp.ne.s32.totalorder %s181, %s184
      %p190 = scmp.eq.s32.totalorder %s21, 0
      %p191 = por %p189, %p190
      %p192 = scmp.ne.s32.totalorder %s181, %s184
      %p193 = scmp.eq.s32.totalorder %s26, 1
      %p194 = por %p192, %p193
      %p195 = scmp.ne.s32.totalorder %s184, %s185
      %p196 = scmp.eq.s32.totalorder %s26, 0
      %p197 = por %p195, %p196
      %p198 = scmp.ne.s32.totalorder %s184, %s185
      %p199 = scmp.eq.s32.totalorder %s27, 1
      %p200 = por %p198, %p199
      %p202 = scmp.ne.s32.totalorder %s185, %s201
      %p203 = scmp.eq.s32.totalorder %s27, 0
      %p204 = por %p202, %p203
      %p205 = scmp.le.s32.totalorder 1, %s21
      %p206 = scmp.lt.s32.totalorder %s21, 3
      %p207 = pnand %p205, %p206
      %p208 = pneg %p207
      // Predicated region
      $region9: #{tpu_custom_call.1} parent=5 // pred_check
        _
      $region10: #{tpu_custom_call.1} parent=5 // pred_check_branch
        %210 = sbr.rel (%p207) target = $region12
      $region11: #{tpu_custom_call.1} parent=5 // pred_region
        %s211 = ssub.s32 %s21, 1
        // Predicated region
        $region13: #{tpu_custom_call.1} parent=11 // pred_check
          %p212 = pneg %p54
        $region14: #{tpu_custom_call.1} parent=11 // pred_check_branch
          %214 = sbr.rel (%p212) target = $region16
        $region15: #{tpu_custom_call.1} parent=11 // pred_region
          %s216 = ssub.s32 16, 16
          %217 = vsyncadd [#allocation6], %s216
          %220 = dma.hbm_to_smem %s0, 16, [#allocation3], [#allocation6]
        $region16: #{tpu_custom_call.1} parent=11 // pred_fallthru
          _
        // Predicated region
        $region17: #{tpu_custom_call.1} parent=11 // pred_check
          %p221 = pneg %p80
        $region18: #{tpu_custom_call.1} parent=11 // pred_check_branch
          %223 = sbr.rel (%p221) target = $region20
        $region19: #{tpu_custom_call.1} parent=11 // pred_region
          %s225 = ssub.s32 128, 128
          %226 = vsyncadd [#allocation4], %s225
          %s227 = smul.addr %s30, 128
          %s228 = scalar_lea.hbm %s1, %s227
          %s230 = sshll.u32 [#allocation7], 4
          %s231 = int_to_ptr.vmem [resolvable:$true] %s230
          %233 = dma.hbm_to_vmem [thread:$0]  %s228, 128, %s231, [#allocation4]
        $region20: #{tpu_custom_call.1} parent=11 // pred_fallthru
          _
        // Predicated region
        $region21: #{tpu_custom_call.1} parent=11 // pred_check
          %p234 = pneg %p127
        $region22: #{tpu_custom_call.1} parent=11 // pred_check_branch
          %236 = sbr.rel (%p234) target = $region24
        $region23: #{tpu_custom_call.1} parent=11 // pred_region
          %s238 = ssub.s32 2048, 2048
          %239 = vsyncadd [#allocation9], %s238
          %s240 = sshll.u32 [#allocation10], 4
          %s241 = int_to_ptr.vmem [resolvable:$true] %s240
          %246 = dma.hbm_to_vmem [thread:$0]  %s3, 2048, %s241, [#allocation9], 128, 128, 8
        $region24: #{tpu_custom_call.1} parent=11 // pred_fallthru
          _
        // Predicated region
        $region25: #{tpu_custom_call.1} parent=11 // pred_check
          %p247 = pneg %p148
        $region26: #{tpu_custom_call.1} parent=11 // pred_check_branch
          %249 = sbr.rel (%p247) target = $region28
        $region27: #{tpu_custom_call.1} parent=11 // pred_region
          %s251 = ssub.s32 2048, 2048
          %252 = vsyncadd [#allocation12], %s251
          %s253 = sshll.u32 [#allocation11], 4
          %s254 = int_to_ptr.vmem [resolvable:$true] %s253
          %259 = dma.hbm_to_vmem [thread:$0]  %s4, 2048, %s254, [#allocation12], 128, 128, 8
        $region28: #{tpu_custom_call.1} parent=11 // pred_fallthru
          _
        // Predicated region
        $region29: #{tpu_custom_call.1} parent=11 // pred_check
          %p260 = pneg %p169
        $region30: #{tpu_custom_call.1} parent=11 // pred_check_branch
          %262 = sbr.rel (%p260) target = $region32
        $region31: #{tpu_custom_call.1} parent=11 // pred_region
          _
        $region32: #{tpu_custom_call.1} parent=11 // pred_fallthru
          _
      $region12: #{tpu_custom_call.1} parent=5 // pred_fallthru
        _
      %p263 = scmp.lt.s32.totalorder %s21, 2
      // Predicated region
      $region33: #{tpu_custom_call.1} parent=5 // pred_check
        %p264 = pneg %p263
      $region34: #{tpu_custom_call.1} parent=5 // pred_check_branch
        %266 = sbr.rel (%p264) target = $region36
      $region35: #{tpu_custom_call.1} parent=5 // pred_region
        // Predicated region
        $region37: #{tpu_custom_call.1} parent=35 // pred_check
          %p267 = pneg %p100
        $region38: #{tpu_custom_call.1} parent=35 // pred_check_branch
          %269 = sbr.rel (%p267) target = $region40
        $region39: #{tpu_custom_call.1} parent=35 // pred_region
          %s270 = sand.u32 %s21, 1
          %s271 = scalar_lea.sflag [#allocation9], %s270
          %s272 = sand.u32 %s90, 1
          %s273 = smul.addr %s272, 8
          %s274 = scalar_lea.vmem [#allocation8], %s273
          %s275 = smul.u32 8, %s29
          %s277 = ssub.s32 128, 128
          %278 = vsyncadd %s271, %s277
          %s279 = smul.addr %s275, 16
          %s280 = scalar_lea.hbm %s2, %s279
          %s281 = sshll.u32 %s274, 4
          %s282 = int_to_ptr.vmem [resolvable:$true] %s281
          %287 = dma.hbm_to_vmem [thread:$0]  %s280, 128, %s282, %s271, 16, 16, 1
        $region40: #{tpu_custom_call.1} parent=35 // pred_fallthru
          _
      $region36: #{tpu_custom_call.1} parent=5 // pred_fallthru
        _
      %p288 = scmp.le.s32.totalorder 1, %s21
      %p289 = scmp.lt.s32.totalorder %s21, 3
      %p290 = pnand %p288, %p289
      %p291 = pneg %p290
      // Predicated region
      $region41: #{tpu_custom_call.1} parent=5 // pred_check
        _
      $region42: #{tpu_custom_call.1} parent=5 // pred_check_branch
        %293 = sbr.rel (%p290) target = $region44
      $region43: #{tpu_custom_call.1} parent=5 // pred_region
        %s294 = ssub.s32 %s21, 1
        // Predicated region
        $region45: #{tpu_custom_call.1} parent=43 // pred_check
          %p295 = pneg %p54
        $region46: #{tpu_custom_call.1} parent=43 // pred_check_branch
          %297 = sbr.rel (%p295) target = $region48
        $region47: #{tpu_custom_call.1} parent=43 // pred_region
          %298 = dma.done [#allocation6], 16
        $region48: #{tpu_custom_call.1} parent=43 // pred_fallthru
          _
        // Predicated region
        $region49: #{tpu_custom_call.1} parent=43 // pred_check
          %p299 = pneg %p80
        $region50: #{tpu_custom_call.1} parent=43 // pred_check_branch
          %301 = sbr.rel (%p299) target = $region52
        $region51: #{tpu_custom_call.1} parent=43 // pred_region
          %302 = dma.done [#allocation4], 128
        $region52: #{tpu_custom_call.1} parent=43 // pred_fallthru
          _
        %s303 = sand.u32 %s26, 1
        %s304 = scalar_lea.sflag [#allocation9], %s303
        %s305 = sand.u32 %s93, 1
        %s306 = smul.addr %s305, 8
        %s307 = scalar_lea.vmem [#allocation8], %s306
        // Predicated region
        $region53: #{tpu_custom_call.1} parent=43 // pred_check
          %p308 = pneg %p106
        $region54: #{tpu_custom_call.1} parent=43 // pred_check_branch
          %310 = sbr.rel (%p308) target = $region56
        $region55: #{tpu_custom_call.1} parent=43 // pred_region
          %311 = dma.done %s304, 128
        $region56: #{tpu_custom_call.1} parent=43 // pred_fallthru
          _
        // Predicated region
        $region57: #{tpu_custom_call.1} parent=43 // pred_check
          %p312 = pneg %p127
        $region58: #{tpu_custom_call.1} parent=43 // pred_check_branch
          %314 = sbr.rel (%p312) target = $region60
        $region59: #{tpu_custom_call.1} parent=43 // pred_region
          %315 = dma.done [#allocation9], 2048
        $region60: #{tpu_custom_call.1} parent=43 // pred_fallthru
          _
        // Predicated region
        $region61: #{tpu_custom_call.1} parent=43 // pred_check
          %p316 = pneg %p148
        $region62: #{tpu_custom_call.1} parent=43 // pred_check_branch
          %318 = sbr.rel (%p316) target = $region64
        $region63: #{tpu_custom_call.1} parent=43 // pred_region
          %319 = dma.done [#allocation12], 2048
        $region64: #{tpu_custom_call.1} parent=43 // pred_fallthru
          _
        %320 = sfence
        %p321 = pneg %p54
        %p322 = pneg %p51
        %p323 = pneg %p80
        %p324 = pneg %p77
        %s325 = sand.u32 %s26, 1
        %s326 = scalar_lea.sflag [#allocation9], %s325
        %s327 = sand.u32 %s93, 1
        %s328 = smul.addr %s327, 8
        %s329 = scalar_lea.vmem [#allocation8], %s328
        %p330 = pneg %p106
        %p331 = pneg %p103
        %p332 = pneg %p127
        %p333 = pneg %p124
        %p334 = pneg %p148
        %p335 = pneg %p145
        %p336 = pneg %p169
        %p337 = pneg %p166
        %p338 = pneg %p197
        %p339 = pneg %p194
        %s340 = sand.u32 %s184, 1
        %s341 = scalar_lea.sflag [#allocation5], %s340
        %s342 = sand.u32 %s184, 1
        %s343 = smul.addr %s342, 64
        %s344 = scalar_lea.vmem [#allocation13], %s343
        %s345 = smul.u32 8, %s31
        %s346 = smul.u32 8, %s31
        %p347 = scmp.eq.s32.totalorder %s31, 0
        // Predicated region
        $region65: #{tpu_custom_call.1} parent=43 // pred_check
          %p348 = pneg %p347
        $region66: #{tpu_custom_call.1} parent=43 // pred_check_branch
          %350 = sbr.rel (%p348) target = $region68
        $region67: #{tpu_custom_call.1} parent=43 // pred_region
          %v351 = vld [vmem:[#allocation7] sm:$0xff]
          %352 = vst [vmem:[#allocation2] sm:$0xff] %v351
        $region68: #{tpu_custom_call.1} parent=43 // pred_fallthru
          _
        %v353 = vld [vmem:[#allocation10] sm:$0xff]
        %v354 = vld [vmem:[#allocation10 + $0x8] sm:$0xff]
        %v355 = vld [vmem:[#allocation10 + $0x10] sm:$0xff]
        %v356 = vld [vmem:[#allocation10 + $0x18] sm:$0xff]
        %v357 = vld [vmem:[#allocation10 + $0x20] sm:$0xff]
        %v358 = vld [vmem:[#allocation10 + $0x28] sm:$0xff]
        %v359 = vld [vmem:[#allocation10 + $0x30] sm:$0xff]
        %v360 = vld [vmem:[#allocation10 + $0x38] sm:$0xff]
        %v361 = vld [vmem:[#allocation10 + $0x40] sm:$0xff]
        %v362 = vld [vmem:[#allocation10 + $0x48] sm:$0xff]
        %v363 = vld [vmem:[#allocation10 + $0x50] sm:$0xff]
        %v364 = vld [vmem:[#allocation10 + $0x58] sm:$0xff]
        %v365 = vld [vmem:[#allocation10 + $0x60] sm:$0xff]
        %v366 = vld [vmem:[#allocation10 + $0x68] sm:$0xff]
        %v367 = vld [vmem:[#allocation10 + $0x70] sm:$0xff]
        %v368 = vld [vmem:[#allocation10 + $0x78] sm:$0xff]
        %v369 = vld [vmem:[#allocation11] sm:$0xff]
        %v370 = vld [vmem:[#allocation11 + $0x8] sm:$0xff]
        %v371 = vld [vmem:[#allocation11 + $0x10] sm:$0xff]
        %v372 = vld [vmem:[#allocation11 + $0x18] sm:$0xff]
        %v373 = vld [vmem:[#allocation11 + $0x20] sm:$0xff]
        %v374 = vld [vmem:[#allocation11 + $0x28] sm:$0xff]
        %v375 = vld [vmem:[#allocation11 + $0x30] sm:$0xff]
        %v376 = vld [vmem:[#allocation11 + $0x38] sm:$0xff]
        %v377 = vld [vmem:[#allocation11 + $0x40] sm:$0xff]
        %v378 = vld [vmem:[#allocation11 + $0x48] sm:$0xff]
        %v379 = vld [vmem:[#allocation11 + $0x50] sm:$0xff]
        %v380 = vld [vmem:[#allocation11 + $0x58] sm:$0xff]
        %v381 = vld [vmem:[#allocation11 + $0x60] sm:$0xff]
        %v382 = vld [vmem:[#allocation11 + $0x68] sm:$0xff]
        %v383 = vld [vmem:[#allocation11 + $0x70] sm:$0xff]
        %v384 = vld [vmem:[#allocation11 + $0x78] sm:$0xff]
        %v385 = vld [vmem:[%s5] sm:$0x1]
        %v387 = vlaneseq
        %v388 = vshrl.u32 %v387, 7
        %v389 = vsub.s32 0, %v388
        %v390 = vrot.slane %v385, %v389
        %s392 = smul.u32 %s31, 8
        %v393 = vld [vmem:[#allocation2] sm:$0xff]
        %s394 = sld [smem:[#allocation3 + %s392]]
        %v395 = vld [vmem:[%s307] sm:$0x1]
        %v397 = vlaneseq
        %v398 = vshrl.u32 %v397, 7
        %v399 = vsub.s32 0, %v398
        %v400 = vrot.slane %v395, %v399
        %402 = vmatprep.subr.mxu0 0.0
        %403 = vmatpush1.msra.mxu0 %v353
        %404 = vmatprep.subr.mxu0 0.0
        %405 = vmatpush1.msra.mxu0 %v354
        %406 = vmatprep.subr.mxu0 0.0
        %407 = vmatpush1.msra.mxu0 %v355
        %408 = vmatprep.subr.mxu0 0.0
        %409 = vmatpush1.msra.mxu0 %v356
        %410 = vmatprep.subr.mxu0 0.0
        %411 = vmatpush1.msra.mxu0 %v357
        %412 = vmatprep.subr.mxu0 0.0
        %413 = vmatpush1.msra.mxu0 %v358
        %414 = vmatprep.subr.mxu0 0.0
        %415 = vmatpush1.msra.mxu0 %v359
        %416 = vmatprep.subr.mxu0 0.0
        %417 = vmatpush1.msra.mxu0 %v360
        %418 = vmatprep.subr.mxu0 0.0
        %419 = vmatpush1.msra.mxu0 %v361
        %420 = vmatprep.subr.mxu0 0.0
        %421 = vmatpush1.msra.mxu0 %v362
        %422 = vmatprep.subr.mxu0 0.0
        %423 = vmatpush1.msra.mxu0 %v363
        %424 = vmatprep.subr.mxu0 0.0
        %425 = vmatpush1.msra.mxu0 %v364
        %426 = vmatprep.subr.mxu0 0.0
        %427 = vmatpush1.msra.mxu0 %v365
        %428 = vmatprep.subr.mxu0 0.0
        %429 = vmatpush1.msra.mxu0 %v366
        %430 = vmatprep.subr.mxu0 0.0
        %431 = vmatpush1.msra.mxu0 %v367
        %432 = vmatprep.subr.mxu0 0.0
        %433 = vmatpush1.msra.mxu0 %v368
        %434 = vmatprep.subr.mxu0 0.0
        %435 = vmatpush1.msra.mxu0 0.0
        %436 = vmatprep.subr.mxu0 0.0
        %437 = vmatpush1.msra.mxu0 0.0
        %438 = vmatprep.subr.mxu0 0.0
        %439 = vmatpush1.msra.mxu0 0.0
        %440 = vmatprep.subr.mxu0 0.0
        %441 = vmatpush1.msra.mxu0 0.0
        %442 = vmatprep.subr.mxu0 0.0
        %443 = vmatpush1.msra.mxu0 0.0
        %444 = vmatprep.subr.mxu0 0.0
        %445 = vmatpush1.msra.mxu0 0.0
        %446 = vmatprep.subr.mxu0 0.0
        %447 = vmatpush1.msra.mxu0 0.0
        %448 = vmatprep.subr.mxu0 0.0
        %449 = vmatpush1.msra.mxu0 0.0
        %450 = vmatprep.subr.mxu0 0.0
        %451 = vmatpush1.msra.mxu0 0.0
        %452 = vmatprep.subr.mxu0 0.0
        %453 = vmatpush1.msra.mxu0 0.0
        %454 = vmatprep.subr.mxu0 0.0
        %455 = vmatpush1.msra.mxu0 0.0
        %456 = vmatprep.subr.mxu0 0.0
        %457 = vmatpush1.msra.mxu0 0.0
        %458 = vmatprep.subr.mxu0 0.0
        %459 = vmatpush1.msra.mxu0 0.0
        %460 = vmatprep.subr.mxu0 0.0
        %461 = vmatpush1.msra.mxu0 0.0
        %462 = vmatprep.subr.mxu0 0.0
        %463 = vmatpush1.msra.mxu0 0.0
        %464 = vmatprep.subr.mxu0 0.0
        %465 = vmatpush1.msra.mxu0 0.0
        %466 = vmatprep.mubr.f32.mxu0 0.0
        %467 = vmatmul.mubr.f32.gmra.mrb[0].mxu0 %v393
        %v468 = vpop.f32.mrb[0].mxu0
        %v469 = vadd.f32 %v400, %v468
        %v470 = vpop.f32.mrb[0].mxu0
        %471 = vdwg.mxu0
        %v472 = vtanh.pop %v469
        %473 = vmatprep.subr.mxu0 0.0
        %474 = vmatpush1.msra.mxu0 %v369
        %475 = vmatprep.subr.mxu0 0.0
        %476 = vmatpush1.msra.mxu0 %v370
        %477 = vmatprep.subr.mxu0 0.0
        %478 = vmatpush1.msra.mxu0 %v371
        %479 = vmatprep.subr.mxu0 0.0
        %480 = vmatpush1.msra.mxu0 %v372
        %481 = vmatprep.subr.mxu0 0.0
        %482 = vmatpush1.msra.mxu0 %v373
        %483 = vmatprep.subr.mxu0 0.0
        %484 = vmatpush1.msra.mxu0 %v374
        %485 = vmatprep.subr.mxu0 0.0
        %486 = vmatpush1.msra.mxu0 %v375
        %487 = vmatprep.subr.mxu0 0.0
        %488 = vmatpush1.msra.mxu0 %v376
        %489 = vmatprep.subr.mxu0 0.0
        %490 = vmatpush1.msra.mxu0 %v377
        %491 = vmatprep.subr.mxu0 0.0
        %492 = vmatpush1.msra.mxu0 %v378
        %493 = vmatprep.subr.mxu0 0.0
        %494 = vmatpush1.msra.mxu0 %v379
        %495 = vmatprep.subr.mxu0 0.0
        %496 = vmatpush1.msra.mxu0 %v380
        %497 = vmatprep.subr.mxu0 0.0
        %498 = vmatpush1.msra.mxu0 %v381
        %499 = vmatprep.subr.mxu0 0.0
        %500 = vmatpush1.msra.mxu0 %v382
        %501 = vmatprep.subr.mxu0 0.0
        %502 = vmatpush1.msra.mxu0 %v383
        %503 = vmatprep.subr.mxu0 0.0
        %504 = vmatpush1.msra.mxu0 %v384
        %505 = vmatprep.subr.mxu0 0.0
        %506 = vmatpush1.msra.mxu0 0.0
        %507 = vmatprep.subr.mxu0 0.0
        %508 = vmatpush1.msra.mxu0 0.0
        %509 = vmatprep.subr.mxu0 0.0
        %510 = vmatpush1.msra.mxu0 0.0
        %511 = vmatprep.subr.mxu0 0.0
        %512 = vmatpush1.msra.mxu0 0.0
        %513 = vmatprep.subr.mxu0 0.0
        %514 = vmatpush1.msra.mxu0 0.0
        %515 = vmatprep.subr.mxu0 0.0
        %516 = vmatpush1.msra.mxu0 0.0
        %517 = vmatprep.subr.mxu0 0.0
        %518 = vmatpush1.msra.mxu0 0.0
        %519 = vmatprep.subr.mxu0 0.0
        %520 = vmatpush1.msra.mxu0 0.0
        %521 = vmatprep.subr.mxu0 0.0
        %522 = vmatpush1.msra.mxu0 0.0
        %523 = vmatprep.subr.mxu0 0.0
        %524 = vmatpush1.msra.mxu0 0.0
        %525 = vmatprep.subr.mxu0 0.0
        %526 = vmatpush1.msra.mxu0 0.0
        %527 = vmatprep.subr.mxu0 0.0
        %528 = vmatpush1.msra.mxu0 0.0
        %529 = vmatprep.subr.mxu0 0.0
        %530 = vmatpush1.msra.mxu0 0.0
        %531 = vmatprep.subr.mxu0 0.0
        %532 = vmatpush1.msra.mxu0 0.0
        %533 = vmatprep.subr.mxu0 0.0
        %534 = vmatpush1.msra.mxu0 0.0
        %535 = vmatprep.subr.mxu0 0.0
        %536 = vmatpush1.msra.mxu0 0.0
        %537 = vmatprep.mubr.f32.mxu0 0.0
        %538 = vmatmul.mubr.f32.gmra.mrb[0].mxu0 %v472
        %v539 = vpop.f32.mrb[0].mxu0
        %v540 = vadd.f32 %v390, %v539
        %v541 = vpop.f32.mrb[0].mxu0
        %542 = vdwg.mxu0
        %v543 = vstv %s394
        %v544 = vmul.f32 %v543, %v540
        %v545 = vadd.f32 %v393, %v544
        %546 = vst [vmem:[%s344] sm:$0xff] %v545
        %s547 = sadd.s32 %s392, 1
        %s548 = sld [smem:[#allocation3 + %s547]]
        %s549 = scalar_lea.vmem %s307, 1 [#allocation8]
        %v550 = vld [vmem:[%s549] sm:$0x1]
        %v552 = vlaneseq
        %v553 = vshrl.u32 %v552, 7
        %v554 = vsub.s32 0, %v553
        %v555 = vrot.slane %v550, %v554
        %557 = vmatprep.subr.mxu0 0.0
        %558 = vmatpush1.msra.mxu0 %v353
        %559 = vmatprep.subr.mxu0 0.0
        %560 = vmatpush1.msra.mxu0 %v354
        %561 = vmatprep.subr.mxu0 0.0
        %562 = vmatpush1.msra.mxu0 %v355
        %563 = vmatprep.subr.mxu0 0.0
        %564 = vmatpush1.msra.mxu0 %v356
        %565 = vmatprep.subr.mxu0 0.0
        %566 = vmatpush1.msra.mxu0 %v357
        %567 = vmatprep.subr.mxu0 0.0
        %568 = vmatpush1.msra.mxu0 %v358
        %569 = vmatprep.subr.mxu0 0.0
        %570 = vmatpush1.msra.mxu0 %v359
        %571 = vmatprep.subr.mxu0 0.0
        %572 = vmatpush1.msra.mxu0 %v360
        %573 = vmatprep.subr.mxu0 0.0
        %574 = vmatpush1.msra.mxu0 %v361
        %575 = vmatprep.subr.mxu0 0.0
        %576 = vmatpush1.msra.mxu0 %v362
        %577 = vmatprep.subr.mxu0 0.0
        %578 = vmatpush1.msra.mxu0 %v363
        %579 = vmatprep.subr.mxu0 0.0
        %580 = vmatpush1.msra.mxu0 %v364
        %581 = vmatprep.subr.mxu0 0.0
        %582 = vmatpush1.msra.mxu0 %v365
        %583 = vmatprep.subr.mxu0 0.0
        %584 = vmatpush1.msra.mxu0 %v366
        %585 = vmatprep.subr.mxu0 0.0
        %586 = vmatpush1.msra.mxu0 %v367
        %587 = vmatprep.subr.mxu0 0.0
        %588 = vmatpush1.msra.mxu0 %v368
        %589 = vmatprep.subr.mxu0 0.0
        %590 = vmatpush1.msra.mxu0 0.0
        %591 = vmatprep.subr.mxu0 0.0
        %592 = vmatpush1.msra.mxu0 0.0
        %593 = vmatprep.subr.mxu0 0.0
        %594 = vmatpush1.msra.mxu0 0.0
        %595 = vmatprep.subr.mxu0 0.0
        %596 = vmatpush1.msra.mxu0 0.0
        %597 = vmatprep.subr.mxu0 0.0
        %598 = vmatpush1.msra.mxu0 0.0
        %599 = vmatprep.subr.mxu0 0.0
        %600 = vmatpush1.msra.mxu0 0.0
        %601 = vmatprep.subr.mxu0 0.0
        %602 = vmatpush1.msra.mxu0 0.0
        %603 = vmatprep.subr.mxu0 0.0
        %604 = vmatpush1.msra.mxu0 0.0
        %605 = vmatprep.subr.mxu0 0.0
        %606 = vmatpush1.msra.mxu0 0.0
        %607 = vmatprep.subr.mxu0 0.0
        %608 = vmatpush1.msra.mxu0 0.0
        %609 = vmatprep.subr.mxu0 0.0
        %610 = vmatpush1.msra.mxu0 0.0
        %611 = vmatprep.subr.mxu0 0.0
        %612 = vmatpush1.msra.mxu0 0.0
        %613 = vmatprep.subr.mxu0 0.0
        %614 = vmatpush1.msra.mxu0 0.0
        %615 = vmatprep.subr.mxu0 0.0
        %616 = vmatpush1.msra.mxu0 0.0
        %617 = vmatprep.subr.mxu0 0.0
        %618 = vmatpush1.msra.mxu0 0.0
        %619 = vmatprep.subr.mxu0 0.0
        %620 = vmatpush1.msra.mxu0 0.0
        %621 = vmatprep.mubr.f32.mxu0 0.0
        %622 = vmatmul.mubr.f32.gmra.mrb[0].mxu0 %v545
        %v623 = vpop.f32.mrb[0].mxu0
        %v624 = vadd.f32 %v555, %v623
        %v625 = vpop.f32.mrb[0].mxu0
        %626 = vdwg.mxu0
        %v627 = vtanh.pop %v624
        %628 = vmatprep.subr.mxu0 0.0
        %629 = vmatpush1.msra.mxu0 %v369
        %630 = vmatprep.subr.mxu0 0.0
        %631 = vmatpush1.msra.mxu0 %v370
        %632 = vmatprep.subr.mxu0 0.0
        %633 = vmatpush1.msra.mxu0 %v371
        %634 = vmatprep.subr.mxu0 0.0
        %635 = vmatpush1.msra.mxu0 %v372
        %636 = vmatprep.subr.mxu0 0.0
        %637 = vmatpush1.msra.mxu0 %v373
        %638 = vmatprep.subr.mxu0 0.0
        %639 = vmatpush1.msra.mxu0 %v374
        %640 = vmatprep.subr.mxu0 0.0
        %641 = vmatpush1.msra.mxu0 %v375
        %642 = vmatprep.subr.mxu0 0.0
        %643 = vmatpush1.msra.mxu0 %v376
        %644 = vmatprep.subr.mxu0 0.0
        %645 = vmatpush1.msra.mxu0 %v377
        %646 = vmatprep.subr.mxu0 0.0
        %647 = vmatpush1.msra.mxu0 %v378
        %648 = vmatprep.subr.mxu0 0.0
        %649 = vmatpush1.msra.mxu0 %v379
        %650 = vmatprep.subr.mxu0 0.0
        %651 = vmatpush1.msra.mxu0 %v380
        %652 = vmatprep.subr.mxu0 0.0
        %653 = vmatpush1.msra.mxu0 %v381
        %654 = vmatprep.subr.mxu0 0.0
        %655 = vmatpush1.msra.mxu0 %v382
        %656 = vmatprep.subr.mxu0 0.0
        %657 = vmatpush1.msra.mxu0 %v383
        %658 = vmatprep.subr.mxu0 0.0
        %659 = vmatpush1.msra.mxu0 %v384
        %660 = vmatprep.subr.mxu0 0.0
        %661 = vmatpush1.msra.mxu0 0.0
        %662 = vmatprep.subr.mxu0 0.0
        %663 = vmatpush1.msra.mxu0 0.0
        %664 = vmatprep.subr.mxu0 0.0
        %665 = vmatpush1.msra.mxu0 0.0
        %666 = vmatprep.subr.mxu0 0.0
        %667 = vmatpush1.msra.mxu0 0.0
        %668 = vmatprep.subr.mxu0 0.0
        %669 = vmatpush1.msra.mxu0 0.0
        %670 = vmatprep.subr.mxu0 0.0
        %671 = vmatpush1.msra.mxu0 0.0
        %672 = vmatprep.subr.mxu0 0.0
        %673 = vmatpush1.msra.mxu0 0.0
        %674 = vmatprep.subr.mxu0 0.0
        %675 = vmatpush1.msra.mxu0 0.0
        %676 = vmatprep.subr.mxu0 0.0
        %677 = vmatpush1.msra.mxu0 0.0
        %678 = vmatprep.subr.mxu0 0.0
        %679 = vmatpush1.msra.mxu0 0.0
        %680 = vmatprep.subr.mxu0 0.0
        %681 = vmatpush1.msra.mxu0 0.0
        %682 = vmatprep.subr.mxu0 0.0
        %683 = vmatpush1.msra.mxu0 0.0
        %684 = vmatprep.subr.mxu0 0.0
        %685 = vmatpush1.msra.mxu0 0.0
        %686 = vmatprep.subr.mxu0 0.0
        %687 = vmatpush1.msra.mxu0 0.0
        %688 = vmatprep.subr.mxu0 0.0
        %689 = vmatpush1.msra.mxu0 0.0
        %690 = vmatprep.subr.mxu0 0.0
        %691 = vmatpush1.msra.mxu0 0.0
        %692 = vmatprep.mubr.f32.mxu0 0.0
        %693 = vmatmul.mubr.f32.gmra.mrb[0].mxu0 %v627
        %v694 = vpop.f32.mrb[0].mxu0
        %v695 = vadd.f32 %v390, %v694
        %v696 = vpop.f32.mrb[0].mxu0
        %697 = vdwg.mxu0
        %v698 = vstv %s548
        %v699 = vmul.f32 %v698, %v695
        %v700 = vadd.f32 %v545, %v699
        %s701 = scalar_lea.vmem %s344, 8 [#allocation13]
        %702 = vst [vmem:[%s701] sm:$0xff] %v700
        %s703 = sadd.s32 %s392, 2
        %s704 = sld [smem:[#allocation3 + %s703]]
        %s705 = scalar_lea.vmem %s307, 2 [#allocation8]
        %v706 = vld [vmem:[%s705] sm:$0x1]
        %v708 = vlaneseq
        %v709 = vshrl.u32 %v708, 7
        %v710 = vsub.s32 0, %v709
        %v711 = vrot.slane %v706, %v710
        %713 = vmatprep.subr.mxu0 0.0
        %714 = vmatpush1.msra.mxu0 %v353
        %715 = vmatprep.subr.mxu0 0.0
        %716 = vmatpush1.msra.mxu0 %v354
        %717 = vmatprep.subr.mxu0 0.0
        %718 = vmatpush1.msra.mxu0 %v355
        %719 = vmatprep.subr.mxu0 0.0
        %720 = vmatpush1.msra.mxu0 %v356
        %721 = vmatprep.subr.mxu0 0.0
        %722 = vmatpush1.msra.mxu0 %v357
        %723 = vmatprep.subr.mxu0 0.0
        %724 = vmatpush1.msra.mxu0 %v358
        %725 = vmatprep.subr.mxu0 0.0
        %726 = vmatpush1.msra.mxu0 %v359
        %727 = vmatprep.subr.mxu0 0.0
        %728 = vmatpush1.msra.mxu0 %v360
        %729 = vmatprep.subr.mxu0 0.0
        %730 = vmatpush1.msra.mxu0 %v361
        %731 = vmatprep.subr.mxu0 0.0
        %732 = vmatpush1.msra.mxu0 %v362
        %733 = vmatprep.subr.mxu0 0.0
        %734 = vmatpush1.msra.mxu0 %v363
        %735 = vmatprep.subr.mxu0 0.0
        %736 = vmatpush1.msra.mxu0 %v364
        %737 = vmatprep.subr.mxu0 0.0
        %738 = vmatpush1.msra.mxu0 %v365
        %739 = vmatprep.subr.mxu0 0.0
        %740 = vmatpush1.msra.mxu0 %v366
        %741 = vmatprep.subr.mxu0 0.0
        %742 = vmatpush1.msra.mxu0 %v367
        %743 = vmatprep.subr.mxu0 0.0
        %744 = vmatpush1.msra.mxu0 %v368
        %745 = vmatprep.subr.mxu0 0.0
        %746 = vmatpush1.msra.mxu0 0.0
        %747 = vmatprep.subr.mxu0 0.0
        %748 = vmatpush1.msra.mxu0 0.0
        %749 = vmatprep.subr.mxu0 0.0
        %750 = vmatpush1.msra.mxu0 0.0
        %751 = vmatprep.subr.mxu0 0.0
        %752 = vmatpush1.msra.mxu0 0.0
        %753 = vmatprep.subr.mxu0 0.0
        %754 = vmatpush1.msra.mxu0 0.0
        %755 = vmatprep.subr.mxu0 0.0
        %756 = vmatpush1.msra.mxu0 0.0
        %757 = vmatprep.subr.mxu0 0.0
        %758 = vmatpush1.msra.mxu0 0.0
        %759 = vmatprep.subr.mxu0 0.0
        %760 = vmatpush1.msra.mxu0 0.0
        %761 = vmatprep.subr.mxu0 0.0
        %762 = vmatpush1.msra.mxu0 0.0
        %763 = vmatprep.subr.mxu0 0.0
        %764 = vmatpush1.msra.mxu0 0.0
        %765 = vmatprep.subr.mxu0 0.0
        %766 = vmatpush1.msra.mxu0 0.0
        %767 = vmatprep.subr.mxu0 0.0
        %768 = vmatpush1.msra.mxu0 0.0
        %769 = vmatprep.subr.mxu0 0.0
        %770 = vmatpush1.msra.mxu0 0.0
        %771 = vmatprep.subr.mxu0 0.0
        %772 = vmatpush1.msra.mxu0 0.0
        %773 = vmatprep.subr.mxu0 0.0
        %774 = vmatpush1.msra.mxu0 0.0
        %775 = vmatprep.subr.mxu0 0.0
        %776 = vmatpush1.msra.mxu0 0.0
        %777 = vmatprep.mubr.f32.mxu0 0.0
        %778 = vmatmul.mubr.f32.gmra.mrb[0].mxu0 %v700
        %v779 = vpop.f32.mrb[0].mxu0
        %v780 = vadd.f32 %v711, %v779
        %v781 = vpop.f32.mrb[0].mxu0
        %782 = vdwg.mxu0
        %v783 = vtanh.pop %v780
        %784 = vmatprep.subr.mxu0 0.0
        %785 = vmatpush1.msra.mxu0 %v369
        %786 = vmatprep.subr.mxu0 0.0
        %787 = vmatpush1.msra.mxu0 %v370
        %788 = vmatprep.subr.mxu0 0.0
        %789 = vmatpush1.msra.mxu0 %v371
        %790 = vmatprep.subr.mxu0 0.0
        %791 = vmatpush1.msra.mxu0 %v372
        %792 = vmatprep.subr.mxu0 0.0
        %793 = vmatpush1.msra.mxu0 %v373
        %794 = vmatprep.subr.mxu0 0.0
        %795 = vmatpush1.msra.mxu0 %v374
        %796 = vmatprep.subr.mxu0 0.0
        %797 = vmatpush1.msra.mxu0 %v375
        %798 = vmatprep.subr.mxu0 0.0
        %799 = vmatpush1.msra.mxu0 %v376
        %800 = vmatprep.subr.mxu0 0.0
        %801 = vmatpush1.msra.mxu0 %v377
        %802 = vmatprep.subr.mxu0 0.0
        %803 = vmatpush1.msra.mxu0 %v378
        %804 = vmatprep.subr.mxu0 0.0
        %805 = vmatpush1.msra.mxu0 %v379
        %806 = vmatprep.subr.mxu0 0.0
        %807 = vmatpush1.msra.mxu0 %v380
        %808 = vmatprep.subr.mxu0 0.0
        %809 = vmatpush1.msra.mxu0 %v381
        %810 = vmatprep.subr.mxu0 0.0
        %811 = vmatpush1.msra.mxu0 %v382
        %812 = vmatprep.subr.mxu0 0.0
        %813 = vmatpush1.msra.mxu0 %v383
        %814 = vmatprep.subr.mxu0 0.0
        %815 = vmatpush1.msra.mxu0 %v384
        %816 = vmatprep.subr.mxu0 0.0
        %817 = vmatpush1.msra.mxu0 0.0
        %818 = vmatprep.subr.mxu0 0.0
        %819 = vmatpush1.msra.mxu0 0.0
        %820 = vmatprep.subr.mxu0 0.0
        %821 = vmatpush1.msra.mxu0 0.0
        %822 = vmatprep.subr.mxu0 0.0
        %823 = vmatpush1.msra.mxu0 0.0
        %824 = vmatprep.subr.mxu0 0.0
        %825 = vmatpush1.msra.mxu0 0.0
        %826 = vmatprep.subr.mxu0 0.0
        %827 = vmatpush1.msra.mxu0 0.0
        %828 = vmatprep.subr.mxu0 0.0
        %829 = vmatpush1.msra.mxu0 0.0
        %830 = vmatprep.subr.mxu0 0.0
        %831 = vmatpush1.msra.mxu0 0.0
        %832 = vmatprep.subr.mxu0 0.0
        %833 = vmatpush1.msra.mxu0 0.0
        %834 = vmatprep.subr.mxu0 0.0
        %835 = vmatpush1.msra.mxu0 0.0
        %836 = vmatprep.subr.mxu0 0.0
        %837 = vmatpush1.msra.mxu0 0.0
        %838 = vmatprep.subr.mxu0 0.0
        %839 = vmatpush1.msra.mxu0 0.0
        %840 = vmatprep.subr.mxu0 0.0
        %841 = vmatpush1.msra.mxu0 0.0
        %842 = vmatprep.subr.mxu0 0.0
        %843 = vmatpush1.msra.mxu0 0.0
        %844 = vmatprep.subr.mxu0 0.0
        %845 = vmatpush1.msra.mxu0 0.0
        %846 = vmatprep.subr.mxu0 0.0
        %847 = vmatpush1.msra.mxu0 0.0
        %848 = vmatprep.mubr.f32.mxu0 0.0
        %849 = vmatmul.mubr.f32.gmra.mrb[0].mxu0 %v783
        %v850 = vpop.f32.mrb[0].mxu0
        %v851 = vadd.f32 %v390, %v850
        %v852 = vpop.f32.mrb[0].mxu0
        %853 = vdwg.mxu0
        %v854 = vstv %s704
        %v855 = vmul.f32 %v854, %v851
        %v856 = vadd.f32 %v700, %v855
        %s857 = scalar_lea.vmem %s344, 16 [#allocation13]
        %858 = vst [vmem:[%s857] sm:$0xff] %v856
        %s859 = sadd.s32 %s392, 3
        %s860 = sld [smem:[#allocation3 + %s859]]
        %s861 = scalar_lea.vmem %s307, 3 [#allocation8]
        %v862 = vld [vmem:[%s861] sm:$0x1]
        %v864 = vlaneseq
        %v865 = vshrl.u32 %v864, 7
        %v866 = vsub.s32 0, %v865
        %v867 = vrot.slane %v862, %v866
        %869 = vmatprep.subr.mxu0 0.0
        %870 = vmatpush1.msra.mxu0 %v353
        %871 = vmatprep.subr.mxu0 0.0
        %872 = vmatpush1.msra.mxu0 %v354
        %873 = vmatprep.subr.mxu0 0.0
        %874 = vmatpush1.msra.mxu0 %v355
        %875 = vmatprep.subr.mxu0 0.0
        %876 = vmatpush1.msra.mxu0 %v356
        %877 = vmatprep.subr.mxu0 0.0
        %878 = vmatpush1.msra.mxu0 %v357
        %879 = vmatprep.subr.mxu0 0.0
        %880 = vmatpush1.msra.mxu0 %v358
        %881 = vmatprep.subr.mxu0 0.0
        %882 = vmatpush1.msra.mxu0 %v359
        %883 = vmatprep.subr.mxu0 0.0
        %884 = vmatpush1.msra.mxu0 %v360
        %885 = vmatprep.subr.mxu0 0.0
        %886 = vmatpush1.msra.mxu0 %v361
        %887 = vmatprep.subr.mxu0 0.0
        %888 = vmatpush1.msra.mxu0 %v362
        %889 = vmatprep.subr.mxu0 0.0
        %890 = vmatpush1.msra.mxu0 %v363
        %891 = vmatprep.subr.mxu0 0.0
        %892 = vmatpush1.msra.mxu0 %v364
        %893 = vmatprep.subr.mxu0 0.0
        %894 = vmatpush1.msra.mxu0 %v365
        %895 = vmatprep.subr.mxu0 0.0
        %896 = vmatpush1.msra.mxu0 %v366
        %897 = vmatprep.subr.mxu0 0.0
        %898 = vmatpush1.msra.mxu0 %v367
        %899 = vmatprep.subr.mxu0 0.0
        %900 = vmatpush1.msra.mxu0 %v368
        %901 = vmatprep.subr.mxu0 0.0
        %902 = vmatpush1.msra.mxu0 0.0
        %903 = vmatprep.subr.mxu0 0.0
        %904 = vmatpush1.msra.mxu0 0.0
        %905 = vmatprep.subr.mxu0 0.0
        %906 = vmatpush1.msra.mxu0 0.0
        %907 = vmatprep.subr.mxu0 0.0
        %908 = vmatpush1.msra.mxu0 0.0
        %909 = vmatprep.subr.mxu0 0.0
        %910 = vmatpush1.msra.mxu0 0.0
        %911 = vmatprep.subr.mxu0 0.0
        %912 = vmatpush1.msra.mxu0 0.0
        %913 = vmatprep.subr.mxu0 0.0
        %914 = vmatpush1.msra.mxu0 0.0
        %915 = vmatprep.subr.mxu0 0.0
        %916 = vmatpush1.msra.mxu0 0.0
        %917 = vmatprep.subr.mxu0 0.0
        %918 = vmatpush1.msra.mxu0 0.0
        %919 = vmatprep.subr.mxu0 0.0
        %920 = vmatpush1.msra.mxu0 0.0
        %921 = vmatprep.subr.mxu0 0.0
        %922 = vmatpush1.msra.mxu0 0.0
        %923 = vmatprep.subr.mxu0 0.0
        %924 = vmatpush1.msra.mxu0 0.0
        %925 = vmatprep.subr.mxu0 0.0
        %926 = vmatpush1.msra.mxu0 0.0
        %927 = vmatprep.subr.mxu0 0.0
        %928 = vmatpush1.msra.mxu0 0.0
        %929 = vmatprep.subr.mxu0 0.0
        %930 = vmatpush1.msra.mxu0 0.0
        %931 = vmatprep.subr.mxu0 0.0
        %932 = vmatpush1.msra.mxu0 0.0
        %933 = vmatprep.mubr.f32.mxu0 0.0
        %934 = vmatmul.mubr.f32.gmra.mrb[0].mxu0 %v856
        %v935 = vpop.f32.mrb[0].mxu0
        %v936 = vadd.f32 %v867, %v935
        %v937 = vpop.f32.mrb[0].mxu0
        %938 = vdwg.mxu0
        %v939 = vtanh.pop %v936
        %940 = vmatprep.subr.mxu0 0.0
        %941 = vmatpush1.msra.mxu0 %v369
        %942 = vmatprep.subr.mxu0 0.0
        %943 = vmatpush1.msra.mxu0 %v370
        %944 = vmatprep.subr.mxu0 0.0
        %945 = vmatpush1.msra.mxu0 %v371
        %946 = vmatprep.subr.mxu0 0.0
        %947 = vmatpush1.msra.mxu0 %v372
        %948 = vmatprep.subr.mxu0 0.0
        %949 = vmatpush1.msra.mxu0 %v373
        %950 = vmatprep.subr.mxu0 0.0
        %951 = vmatpush1.msra.mxu0 %v374
        %952 = vmatprep.subr.mxu0 0.0
        %953 = vmatpush1.msra.mxu0 %v375
        %954 = vmatprep.subr.mxu0 0.0
        %955 = vmatpush1.msra.mxu0 %v376
        %956 = vmatprep.subr.mxu0 0.0
        %957 = vmatpush1.msra.mxu0 %v377
        %958 = vmatprep.subr.mxu0 0.0
        %959 = vmatpush1.msra.mxu0 %v378
        %960 = vmatprep.subr.mxu0 0.0
        %961 = vmatpush1.msra.mxu0 %v379
        %962 = vmatprep.subr.mxu0 0.0
        %963 = vmatpush1.msra.mxu0 %v380
        %964 = vmatprep.subr.mxu0 0.0
        %965 = vmatpush1.msra.mxu0 %v381
        %966 = vmatprep.subr.mxu0 0.0
        %967 = vmatpush1.msra.mxu0 %v382
        %968 = vmatprep.subr.mxu0 0.0
        %969 = vmatpush1.msra.mxu0 %v383
        %970 = vmatprep.subr.mxu0 0.0
        %971 = vmatpush1.msra.mxu0 %v384
        %972 = vmatprep.subr.mxu0 0.0
        %973 = vmatpush1.msra.mxu0 0.0
        %974 = vmatprep.subr.mxu0 0.0
        %975 = vmatpush1.msra.mxu0 0.0
        %976 = vmatprep.subr.mxu0 0.0
        %977 = vmatpush1.msra.mxu0 0.0
        %978 = vmatprep.subr.mxu0 0.0
        %979 = vmatpush1.msra.mxu0 0.0
        %980 = vmatprep.subr.mxu0 0.0
        %981 = vmatpush1.msra.mxu0 0.0
        %982 = vmatprep.subr.mxu0 0.0
        %983 = vmatpush1.msra.mxu0 0.0
        %984 = vmatprep.subr.mxu0 0.0
        %985 = vmatpush1.msra.mxu0 0.0
        %986 = vmatprep.subr.mxu0 0.0
        %987 = vmatpush1.msra.mxu0 0.0
        %988 = vmatprep.subr.mxu0 0.0
        %989 = vmatpush1.msra.mxu0 0.0
        %990 = vmatprep.subr.mxu0 0.0
        %991 = vmatpush1.msra.mxu0 0.0
        %992 = vmatprep.subr.mxu0 0.0
        %993 = vmatpush1.msra.mxu0 0.0
        %994 = vmatprep.subr.mxu0 0.0
        %995 = vmatpush1.msra.mxu0 0.0
        %996 = vmatprep.subr.mxu0 0.0
        %997 = vmatpush1.msra.mxu0 0.0
        %998 = vmatprep.subr.mxu0 0.0
        %999 = vmatpush1.msra.mxu0 0.0
        %1000 = vmatprep.subr.mxu0 0.0
        %1001 = vmatpush1.msra.mxu0 0.0
        %1002 = vmatprep.subr.mxu0 0.0
        %1003 = vmatpush1.msra.mxu0 0.0
        %1004 = vmatprep.mubr.f32.mxu0 0.0
        %1005 = vmatmul.mubr.f32.gmra.mrb[0].mxu0 %v939
        %v1006 = vpop.f32.mrb[0].mxu0
        %v1007 = vadd.f32 %v390, %v1006
        %v1008 = vpop.f32.mrb[0].mxu0
        %1009 = vdwg.mxu0
        %v1010 = vstv %s860
        %v1011 = vmul.f32 %v1010, %v1007
        %v1012 = vadd.f32 %v856, %v1011
        %s1013 = scalar_lea.vmem %s344, 24 [#allocation13]
        %1014 = vst [vmem:[%s1013] sm:$0xff] %v1012
        %s1015 = sadd.s32 %s392, 4
        %s1016 = sld [smem:[#allocation3 + %s1015]]
        %s1017 = scalar_lea.vmem %s307, 4 [#allocation8]
        %v1018 = vld [vmem:[%s1017] sm:$0x1]
        %v1020 = vlaneseq
        %v1021 = vshrl.u32 %v1020, 7
        %v1022 = vsub.s32 0, %v1021
        %v1023 = vrot.slane %v1018, %v1022
        %1025 = vmatprep.subr.mxu0 0.0
        %1026 = vmatpush1.msra.mxu0 %v353
        %1027 = vmatprep.subr.mxu0 0.0
        %1028 = vmatpush1.msra.mxu0 %v354
        %1029 = vmatprep.subr.mxu0 0.0
        %1030 = vmatpush1.msra.mxu0 %v355
        %1031 = vmatprep.subr.mxu0 0.0
        %1032 = vmatpush1.msra.mxu0 %v356
        %1033 = vmatprep.subr.mxu0 0.0
        %1034 = vmatpush1.msra.mxu0 %v357
        %1035 = vmatprep.subr.mxu0 0.0
        %1036 = vmatpush1.msra.mxu0 %v358
        %1037 = vmatprep.subr.mxu0 0.0
        %1038 = vmatpush1.msra.mxu0 %v359
        %1039 = vmatprep.subr.mxu0 0.0
        %1040 = vmatpush1.msra.mxu0 %v360
        %1041 = vmatprep.subr.mxu0 0.0
        %1042 = vmatpush1.msra.mxu0 %v361
        %1043 = vmatprep.subr.mxu0 0.0
        %1044 = vmatpush1.msra.mxu0 %v362
        %1045 = vmatprep.subr.mxu0 0.0
        %1046 = vmatpush1.msra.mxu0 %v363
        %1047 = vmatprep.subr.mxu0 0.0
        %1048 = vmatpush1.msra.mxu0 %v364
        %1049 = vmatprep.subr.mxu0 0.0
        %1050 = vmatpush1.msra.mxu0 %v365
        %1051 = vmatprep.subr.mxu0 0.0
        %1052 = vmatpush1.msra.mxu0 %v366
        %1053 = vmatprep.subr.mxu0 0.0
        %1054 = vmatpush1.msra.mxu0 %v367
        %1055 = vmatprep.subr.mxu0 0.0
        %1056 = vmatpush1.msra.mxu0 %v368
        %1057 = vmatprep.subr.mxu0 0.0
        %1058 = vmatpush1.msra.mxu0 0.0
        %1059 = vmatprep.subr.mxu0 0.0
        %1060 = vmatpush1.msra.mxu0 0.0
        %1061 = vmatprep.subr.mxu0 0.0
        %1062 = vmatpush1.msra.mxu0 0.0
        %1063 = vmatprep.subr.mxu0 0.0
        %1064 = vmatpush1.msra.mxu0 0.0
        %1065 = vmatprep.subr.mxu0 0.0
        %1066 = vmatpush1.msra.mxu0 0.0
        %1067 = vmatprep.subr.mxu0 0.0
        %1068 = vmatpush1.msra.mxu0 0.0
        %1069 = vmatprep.subr.mxu0 0.0
        %1070 = vmatpush1.msra.mxu0 0.0
        %1071 = vmatprep.subr.mxu0 0.0
        %1072 = vmatpush1.msra.mxu0 0.0
        %1073 = vmatprep.subr.mxu0 0.0
        %1074 = vmatpush1.msra.mxu0 0.0
        %1075 = vmatprep.subr.mxu0 0.0
        %1076 = vmatpush1.msra.mxu0 0.0
        %1077 = vmatprep.subr.mxu0 0.0
        %1078 = vmatpush1.msra.mxu0 0.0
        %1079 = vmatprep.subr.mxu0 0.0
        %1080 = vmatpush1.msra.mxu0 0.0
        %1081 = vmatprep.subr.mxu0 0.0
        %1082 = vmatpush1.msra.mxu0 0.0
        %1083 = vmatprep.subr.mxu0 0.0
        %1084 = vmatpush1.msra.mxu0 0.0
        %1085 = vmatprep.subr.mxu0 0.0
        %1086 = vmatpush1.msra.mxu0 0.0
        %1087 = vmatprep.subr.mxu0 0.0
        %1088 = vmatpush1.msra.mxu0 0.0
        %1089 = vmatprep.mubr.f32.mxu0 0.0
        %1090 = vmatmul.mubr.f32.gmra.mrb[0].mxu0 %v1012
        %v1091 = vpop.f32.mrb[0].mxu0
        %v1092 = vadd.f32 %v1023, %v1091
        %v1093 = vpop.f32.mrb[0].mxu0
        %1094 = vdwg.mxu0
        %v1095 = vtanh.pop %v1092
        %1096 = vmatprep.subr.mxu0 0.0
        %1097 = vmatpush1.msra.mxu0 %v369
        %1098 = vmatprep.subr.mxu0 0.0
        %1099 = vmatpush1.msra.mxu0 %v370
        %1100 = vmatprep.subr.mxu0 0.0
        %1101 = vmatpush1.msra.mxu0 %v371
        %1102 = vmatprep.subr.mxu0 0.0
        %1103 = vmatpush1.msra.mxu0 %v372
        %1104 = vmatprep.subr.mxu0 0.0
        %1105 = vmatpush1.msra.mxu0 %v373
        %1106 = vmatprep.subr.mxu0 0.0
        %1107 = vmatpush1.msra.mxu0 %v374
        %1108 = vmatprep.subr.mxu0 0.0
        %1109 = vmatpush1.msra.mxu0 %v375
        %1110 = vmatprep.subr.mxu0 0.0
        %1111 = vmatpush1.msra.mxu0 %v376
        %1112 = vmatprep.subr.mxu0 0.0
        %1113 = vmatpush1.msra.mxu0 %v377
        %1114 = vmatprep.subr.mxu0 0.0
        %1115 = vmatpush1.msra.mxu0 %v378
        %1116 = vmatprep.subr.mxu0 0.0
        %1117 = vmatpush1.msra.mxu0 %v379
        %1118 = vmatprep.subr.mxu0 0.0
        %1119 = vmatpush1.msra.mxu0 %v380
        %1120 = vmatprep.subr.mxu0 0.0
        %1121 = vmatpush1.msra.mxu0 %v381
        %1122 = vmatprep.subr.mxu0 0.0
        %1123 = vmatpush1.msra.mxu0 %v382
        %1124 = vmatprep.subr.mxu0 0.0
        %1125 = vmatpush1.msra.mxu0 %v383
        %1126 = vmatprep.subr.mxu0 0.0
        %1127 = vmatpush1.msra.mxu0 %v384
        %1128 = vmatprep.subr.mxu0 0.0
        %1129 = vmatpush1.msra.mxu0 0.0
        %1130 = vmatprep.subr.mxu0 0.0
        %1131 = vmatpush1.msra.mxu0 0.0
        %1132 = vmatprep.subr.mxu0 0.0
        %1133 = vmatpush1.msra.mxu0 0.0
        %1134 = vmatprep.subr.mxu0 0.0
        %1135 = vmatpush1.msra.mxu0 0.0
        %1136 = vmatprep.subr.mxu0 0.0
        %1137 = vmatpush1.msra.mxu0 0.0
        %1138 = vmatprep.subr.mxu0 0.0
        %1139 = vmatpush1.msra.mxu0 0.0
        %1140 = vmatprep.subr.mxu0 0.0
        %1141 = vmatpush1.msra.mxu0 0.0
        %1142 = vmatprep.subr.mxu0 0.0
        %1143 = vmatpush1.msra.mxu0 0.0
        %1144 = vmatprep.subr.mxu0 0.0
        %1145 = vmatpush1.msra.mxu0 0.0
        %1146 = vmatprep.subr.mxu0 0.0
        %1147 = vmatpush1.msra.mxu0 0.0
        %1148 = vmatprep.subr.mxu0 0.0
        %1149 = vmatpush1.msra.mxu0 0.0
        %1150 = vmatprep.subr.mxu0 0.0
        %1151 = vmatpush1.msra.mxu0 0.0
        %1152 = vmatprep.subr.mxu0 0.0
        %1153 = vmatpush1.msra.mxu0 0.0
        %1154 = vmatprep.subr.mxu0 0.0
        %1155 = vmatpush1.msra.mxu0 0.0
        %1156 = vmatprep.subr.mxu0 0.0
        %1157 = vmatpush1.msra.mxu0 0.0
        %1158 = vmatprep.subr.mxu0 0.0
        %1159 = vmatpush1.msra.mxu0 0.0
        %1160 = vmatprep.mubr.f32.mxu0 0.0
        %1161 = vmatmul.mubr.f32.gmra.mrb[0].mxu0 %v1095
        %v1162 = vpop.f32.mrb[0].mxu0
        %v1163 = vadd.f32 %v390, %v1162
        %v1164 = vpop.f32.mrb[0].mxu0
        %1165 = vdwg.mxu0
        %v1166 = vstv %s1016
        %v1167 = vmul.f32 %v1166, %v1163
        %v1168 = vadd.f32 %v1012, %v1167
        %s1169 = scalar_lea.vmem %s344, 32 [#allocation13]
        %1170 = vst [vmem:[%s1169] sm:$0xff] %v1168
        %s1171 = sadd.s32 %s392, 5
        %s1172 = sld [smem:[#allocation3 + %s1171]]
        %s1173 = scalar_lea.vmem %s307, 5 [#allocation8]
        %v1174 = vld [vmem:[%s1173] sm:$0x1]
        %v1176 = vlaneseq
        %v1177 = vshrl.u32 %v1176, 7
        %v1178 = vsub.s32 0, %v1177
        %v1179 = vrot.slane %v1174, %v1178
        %1181 = vmatprep.subr.mxu0 0.0
        %1182 = vmatpush1.msra.mxu0 %v353
        %1183 = vmatprep.subr.mxu0 0.0
        %1184 = vmatpush1.msra.mxu0 %v354
        %1185 = vmatprep.subr.mxu0 0.0
        %1186 = vmatpush1.msra.mxu0 %v355
        %1187 = vmatprep.subr.mxu0 0.0
        %1188 = vmatpush1.msra.mxu0 %v356
        %1189 = vmatprep.subr.mxu0 0.0
        %1190 = vmatpush1.msra.mxu0 %v357
        %1191 = vmatprep.subr.mxu0 0.0
        %1192 = vmatpush1.msra.mxu0 %v358
        %1193 = vmatprep.subr.mxu0 0.0
        %1194 = vmatpush1.msra.mxu0 %v359
        %1195 = vmatprep.subr.mxu0 0.0
        %1196 = vmatpush1.msra.mxu0 %v360
        %1197 = vmatprep.subr.mxu0 0.0
        %1198 = vmatpush1.msra.mxu0 %v361
        %1199 = vmatprep.subr.mxu0 0.0
        %1200 = vmatpush1.msra.mxu0 %v362
        %1201 = vmatprep.subr.mxu0 0.0
        %1202 = vmatpush1.msra.mxu0 %v363
        %1203 = vmatprep.subr.mxu0 0.0
        %1204 = vmatpush1.msra.mxu0 %v364
        %1205 = vmatprep.subr.mxu0 0.0
        %1206 = vmatpush1.msra.mxu0 %v365
        %1207 = vmatprep.subr.mxu0 0.0
        %1208 = vmatpush1.msra.mxu0 %v366
        %1209 = vmatprep.subr.mxu0 0.0
        %1210 = vmatpush1.msra.mxu0 %v367
        %1211 = vmatprep.subr.mxu0 0.0
        %1212 = vmatpush1.msra.mxu0 %v368
        %1213 = vmatprep.subr.mxu0 0.0
        %1214 = vmatpush1.msra.mxu0 0.0
        %1215 = vmatprep.subr.mxu0 0.0
        %1216 = vmatpush1.msra.mxu0 0.0
        %1217 = vmatprep.subr.mxu0 0.0
        %1218 = vmatpush1.msra.mxu0 0.0
        %1219 = vmatprep.subr.mxu0 0.0
        %1220 = vmatpush1.msra.mxu0 0.0
        %1221 = vmatprep.subr.mxu0 0.0
        %1222 = vmatpush1.msra.mxu0 0.0
        %1223 = vmatprep.subr.mxu0 0.0
        %1224 = vmatpush1.msra.mxu0 0.0
        %1225 = vmatprep.subr.mxu0 0.0
        %1226 = vmatpush1.msra.mxu0 0.0
        %1227 = vmatprep.subr.mxu0 0.0
        %1228 = vmatpush1.msra.mxu0 0.0
        %1229 = vmatprep.subr.mxu0 0.0
        %1230 = vmatpush1.msra.mxu0 0.0
        %1231 = vmatprep.subr.mxu0 0.0
        %1232 = vmatpush1.msra.mxu0 0.0
        %1233 = vmatprep.subr.mxu0 0.0
        %1234 = vmatpush1.msra.mxu0 0.0
        %1235 = vmatprep.subr.mxu0 0.0
        %1236 = vmatpush1.msra.mxu0 0.0
        %1237 = vmatprep.subr.mxu0 0.0
        %1238 = vmatpush1.msra.mxu0 0.0
        %1239 = vmatprep.subr.mxu0 0.0
        %1240 = vmatpush1.msra.mxu0 0.0
        %1241 = vmatprep.subr.mxu0 0.0
        %1242 = vmatpush1.msra.mxu0 0.0
        %1243 = vmatprep.subr.mxu0 0.0
        %1244 = vmatpush1.msra.mxu0 0.0
        %1245 = vmatprep.mubr.f32.mxu0 0.0
        %1246 = vmatmul.mubr.f32.gmra.mrb[0].mxu0 %v1168
        %v1247 = vpop.f32.mrb[0].mxu0
        %v1248 = vadd.f32 %v1179, %v1247
        %v1249 = vpop.f32.mrb[0].mxu0
        %1250 = vdwg.mxu0
        %v1251 = vtanh.pop %v1248
        %1252 = vmatprep.subr.mxu0 0.0
        %1253 = vmatpush1.msra.mxu0 %v369
        %1254 = vmatprep.subr.mxu0 0.0
        %1255 = vmatpush1.msra.mxu0 %v370
        %1256 = vmatprep.subr.mxu0 0.0
        %1257 = vmatpush1.msra.mxu0 %v371
        %1258 = vmatprep.subr.mxu0 0.0
        %1259 = vmatpush1.msra.mxu0 %v372
        %1260 = vmatprep.subr.mxu0 0.0
        %1261 = vmatpush1.msra.mxu0 %v373
        %1262 = vmatprep.subr.mxu0 0.0
        %1263 = vmatpush1.msra.mxu0 %v374
        %1264 = vmatprep.subr.mxu0 0.0
        %1265 = vmatpush1.msra.mxu0 %v375
        %1266 = vmatprep.subr.mxu0 0.0
        %1267 = vmatpush1.msra.mxu0 %v376
        %1268 = vmatprep.subr.mxu0 0.0
        %1269 = vmatpush1.msra.mxu0 %v377
        %1270 = vmatprep.subr.mxu0 0.0
        %1271 = vmatpush1.msra.mxu0 %v378
        %1272 = vmatprep.subr.mxu0 0.0
        %1273 = vmatpush1.msra.mxu0 %v379
        %1274 = vmatprep.subr.mxu0 0.0
        %1275 = vmatpush1.msra.mxu0 %v380
        %1276 = vmatprep.subr.mxu0 0.0
        %1277 = vmatpush1.msra.mxu0 %v381
        %1278 = vmatprep.subr.mxu0 0.0
        %1279 = vmatpush1.msra.mxu0 %v382
        %1280 = vmatprep.subr.mxu0 0.0
        %1281 = vmatpush1.msra.mxu0 %v383
        %1282 = vmatprep.subr.mxu0 0.0
        %1283 = vmatpush1.msra.mxu0 %v384
        %1284 = vmatprep.subr.mxu0 0.0
        %1285 = vmatpush1.msra.mxu0 0.0
        %1286 = vmatprep.subr.mxu0 0.0
        %1287 = vmatpush1.msra.mxu0 0.0
        %1288 = vmatprep.subr.mxu0 0.0
        %1289 = vmatpush1.msra.mxu0 0.0
        %1290 = vmatprep.subr.mxu0 0.0
        %1291 = vmatpush1.msra.mxu0 0.0
        %1292 = vmatprep.subr.mxu0 0.0
        %1293 = vmatpush1.msra.mxu0 0.0
        %1294 = vmatprep.subr.mxu0 0.0
        %1295 = vmatpush1.msra.mxu0 0.0
        %1296 = vmatprep.subr.mxu0 0.0
        %1297 = vmatpush1.msra.mxu0 0.0
        %1298 = vmatprep.subr.mxu0 0.0
        %1299 = vmatpush1.msra.mxu0 0.0
        %1300 = vmatprep.subr.mxu0 0.0
        %1301 = vmatpush1.msra.mxu0 0.0
        %1302 = vmatprep.subr.mxu0 0.0
        %1303 = vmatpush1.msra.mxu0 0.0
        %1304 = vmatprep.subr.mxu0 0.0
        %1305 = vmatpush1.msra.mxu0 0.0
        %1306 = vmatprep.subr.mxu0 0.0
        %1307 = vmatpush1.msra.mxu0 0.0
        %1308 = vmatprep.subr.mxu0 0.0
        %1309 = vmatpush1.msra.mxu0 0.0
        %1310 = vmatprep.subr.mxu0 0.0
        %1311 = vmatpush1.msra.mxu0 0.0
        %1312 = vmatprep.subr.mxu0 0.0
        %1313 = vmatpush1.msra.mxu0 0.0
        %1314 = vmatprep.subr.mxu0 0.0
        %1315 = vmatpush1.msra.mxu0 0.0
        %1316 = vmatprep.mubr.f32.mxu0 0.0
        %1317 = vmatmul.mubr.f32.gmra.mrb[0].mxu0 %v1251
        %v1318 = vpop.f32.mrb[0].mxu0
        %v1319 = vadd.f32 %v390, %v1318
        %v1320 = vpop.f32.mrb[0].mxu0
        %1321 = vdwg.mxu0
        %v1322 = vstv %s1172
        %v1323 = vmul.f32 %v1322, %v1319
        %v1324 = vadd.f32 %v1168, %v1323
        %s1325 = scalar_lea.vmem %s344, 40 [#allocation13]
        %1326 = vst [vmem:[%s1325] sm:$0xff] %v1324
        %s1327 = sadd.s32 %s392, 6
        %s1328 = sld [smem:[#allocation3 + %s1327]]
        %s1329 = scalar_lea.vmem %s307, 6 [#allocation8]
        %v1330 = vld [vmem:[%s1329] sm:$0x1]
        %v1332 = vlaneseq
        %v1333 = vshrl.u32 %v1332, 7
        %v1334 = vsub.s32 0, %v1333
        %v1335 = vrot.slane %v1330, %v1334
        %1337 = vmatprep.subr.mxu0 0.0
        %1338 = vmatpush1.msra.mxu0 %v353
        %1339 = vmatprep.subr.mxu0 0.0
        %1340 = vmatpush1.msra.mxu0 %v354
        %1341 = vmatprep.subr.mxu0 0.0
        %1342 = vmatpush1.msra.mxu0 %v355
        %1343 = vmatprep.subr.mxu0 0.0
        %1344 = vmatpush1.msra.mxu0 %v356
        %1345 = vmatprep.subr.mxu0 0.0
        %1346 = vmatpush1.msra.mxu0 %v357
        %1347 = vmatprep.subr.mxu0 0.0
        %1348 = vmatpush1.msra.mxu0 %v358
        %1349 = vmatprep.subr.mxu0 0.0
        %1350 = vmatpush1.msra.mxu0 %v359
        %1351 = vmatprep.subr.mxu0 0.0
        %1352 = vmatpush1.msra.mxu0 %v360
        %1353 = vmatprep.subr.mxu0 0.0
        %1354 = vmatpush1.msra.mxu0 %v361
        %1355 = vmatprep.subr.mxu0 0.0
        %1356 = vmatpush1.msra.mxu0 %v362
        %1357 = vmatprep.subr.mxu0 0.0
        %1358 = vmatpush1.msra.mxu0 %v363
        %1359 = vmatprep.subr.mxu0 0.0
        %1360 = vmatpush1.msra.mxu0 %v364
        %1361 = vmatprep.subr.mxu0 0.0
        %1362 = vmatpush1.msra.mxu0 %v365
        %1363 = vmatprep.subr.mxu0 0.0
        %1364 = vmatpush1.msra.mxu0 %v366
        %1365 = vmatprep.subr.mxu0 0.0
        %1366 = vmatpush1.msra.mxu0 %v367
        %1367 = vmatprep.subr.mxu0 0.0
        %1368 = vmatpush1.msra.mxu0 %v368
        %1369 = vmatprep.subr.mxu0 0.0
        %1370 = vmatpush1.msra.mxu0 0.0
        %1371 = vmatprep.subr.mxu0 0.0
        %1372 = vmatpush1.msra.mxu0 0.0
        %1373 = vmatprep.subr.mxu0 0.0
        %1374 = vmatpush1.msra.mxu0 0.0
        %1375 = vmatprep.subr.mxu0 0.0
        %1376 = vmatpush1.msra.mxu0 0.0
        %1377 = vmatprep.subr.mxu0 0.0
        %1378 = vmatpush1.msra.mxu0 0.0
        %1379 = vmatprep.subr.mxu0 0.0
        %1380 = vmatpush1.msra.mxu0 0.0
        %1381 = vmatprep.subr.mxu0 0.0
        %1382 = vmatpush1.msra.mxu0 0.0
        %1383 = vmatprep.subr.mxu0 0.0
        %1384 = vmatpush1.msra.mxu0 0.0
        %1385 = vmatprep.subr.mxu0 0.0
        %1386 = vmatpush1.msra.mxu0 0.0
        %1387 = vmatprep.subr.mxu0 0.0
        %1388 = vmatpush1.msra.mxu0 0.0
        %1389 = vmatprep.subr.mxu0 0.0
        %1390 = vmatpush1.msra.mxu0 0.0
        %1391 = vmatprep.subr.mxu0 0.0
        %1392 = vmatpush1.msra.mxu0 0.0
        %1393 = vmatprep.subr.mxu0 0.0
        %1394 = vmatpush1.msra.mxu0 0.0
        %1395 = vmatprep.subr.mxu0 0.0
        %1396 = vmatpush1.msra.mxu0 0.0
        %1397 = vmatprep.subr.mxu0 0.0
        %1398 = vmatpush1.msra.mxu0 0.0
        %1399 = vmatprep.subr.mxu0 0.0
        %1400 = vmatpush1.msra.mxu0 0.0
        %1401 = vmatprep.mubr.f32.mxu0 0.0
        %1402 = vmatmul.mubr.f32.gmra.mrb[0].mxu0 %v1324
        %v1403 = vpop.f32.mrb[0].mxu0
        %v1404 = vadd.f32 %v1335, %v1403
        %v1405 = vpop.f32.mrb[0].mxu0
        %1406 = vdwg.mxu0
        %v1407 = vtanh.pop %v1404
        %1408 = vmatprep.subr.mxu0 0.0
        %1409 = vmatpush1.msra.mxu0 %v369
        %1410 = vmatprep.subr.mxu0 0.0
        %1411 = vmatpush1.msra.mxu0 %v370
        %1412 = vmatprep.subr.mxu0 0.0
        %1413 = vmatpush1.msra.mxu0 %v371
        %1414 = vmatprep.subr.mxu0 0.0
        %1415 = vmatpush1.msra.mxu0 %v372
        %1416 = vmatprep.subr.mxu0 0.0
        %1417 = vmatpush1.msra.mxu0 %v373
        %1418 = vmatprep.subr.mxu0 0.0
        %1419 = vmatpush1.msra.mxu0 %v374
        %1420 = vmatprep.subr.mxu0 0.0
        %1421 = vmatpush1.msra.mxu0 %v375
        %1422 = vmatprep.subr.mxu0 0.0
        %1423 = vmatpush1.msra.mxu0 %v376
        %1424 = vmatprep.subr.mxu0 0.0
        %1425 = vmatpush1.msra.mxu0 %v377
        %1426 = vmatprep.subr.mxu0 0.0
        %1427 = vmatpush1.msra.mxu0 %v378
        %1428 = vmatprep.subr.mxu0 0.0
        %1429 = vmatpush1.msra.mxu0 %v379
        %1430 = vmatprep.subr.mxu0 0.0
        %1431 = vmatpush1.msra.mxu0 %v380
        %1432 = vmatprep.subr.mxu0 0.0
        %1433 = vmatpush1.msra.mxu0 %v381
        %1434 = vmatprep.subr.mxu0 0.0
        %1435 = vmatpush1.msra.mxu0 %v382
        %1436 = vmatprep.subr.mxu0 0.0
        %1437 = vmatpush1.msra.mxu0 %v383
        %1438 = vmatprep.subr.mxu0 0.0
        %1439 = vmatpush1.msra.mxu0 %v384
        %1440 = vmatprep.subr.mxu0 0.0
        %1441 = vmatpush1.msra.mxu0 0.0
        %1442 = vmatprep.subr.mxu0 0.0
        %1443 = vmatpush1.msra.mxu0 0.0
        %1444 = vmatprep.subr.mxu0 0.0
        %1445 = vmatpush1.msra.mxu0 0.0
        %1446 = vmatprep.subr.mxu0 0.0
        %1447 = vmatpush1.msra.mxu0 0.0
        %1448 = vmatprep.subr.mxu0 0.0
        %1449 = vmatpush1.msra.mxu0 0.0
        %1450 = vmatprep.subr.mxu0 0.0
        %1451 = vmatpush1.msra.mxu0 0.0
        %1452 = vmatprep.subr.mxu0 0.0
        %1453 = vmatpush1.msra.mxu0 0.0
        %1454 = vmatprep.subr.mxu0 0.0
        %1455 = vmatpush1.msra.mxu0 0.0
        %1456 = vmatprep.subr.mxu0 0.0
        %1457 = vmatpush1.msra.mxu0 0.0
        %1458 = vmatprep.subr.mxu0 0.0
        %1459 = vmatpush1.msra.mxu0 0.0
        %1460 = vmatprep.subr.mxu0 0.0
        %1461 = vmatpush1.msra.mxu0 0.0
        %1462 = vmatprep.subr.mxu0 0.0
        %1463 = vmatpush1.msra.mxu0 0.0
        %1464 = vmatprep.subr.mxu0 0.0
        %1465 = vmatpush1.msra.mxu0 0.0
        %1466 = vmatprep.subr.mxu0 0.0
        %1467 = vmatpush1.msra.mxu0 0.0
        %1468 = vmatprep.subr.mxu0 0.0
        %1469 = vmatpush1.msra.mxu0 0.0
        %1470 = vmatprep.subr.mxu0 0.0
        %1471 = vmatpush1.msra.mxu0 0.0
        %1472 = vmatprep.mubr.f32.mxu0 0.0
        %1473 = vmatmul.mubr.f32.gmra.mrb[0].mxu0 %v1407
        %v1474 = vpop.f32.mrb[0].mxu0
        %v1475 = vadd.f32 %v390, %v1474
        %v1476 = vpop.f32.mrb[0].mxu0
        %1477 = vdwg.mxu0
        %v1478 = vstv %s1328
        %v1479 = vmul.f32 %v1478, %v1475
        %v1480 = vadd.f32 %v1324, %v1479
        %s1481 = scalar_lea.vmem %s344, 48 [#allocation13]
        %1482 = vst [vmem:[%s1481] sm:$0xff] %v1480
        %s1483 = sadd.s32 %s392, 7
        %s1484 = sld [smem:[#allocation3 + %s1483]]
        %s1485 = scalar_lea.vmem %s307, 7 [#allocation8]
        %v1486 = vld [vmem:[%s1485] sm:$0x1]
        %v1488 = vlaneseq
        %v1489 = vshrl.u32 %v1488, 7
        %v1490 = vsub.s32 0, %v1489
        %v1491 = vrot.slane %v1486, %v1490
        %1493 = vmatprep.subr.mxu0 0.0
        %1494 = vmatpush1.msra.mxu0 %v353
        %1495 = vmatprep.subr.mxu0 0.0
        %1496 = vmatpush1.msra.mxu0 %v354
        %1497 = vmatprep.subr.mxu0 0.0
        %1498 = vmatpush1.msra.mxu0 %v355
        %1499 = vmatprep.subr.mxu0 0.0
        %1500 = vmatpush1.msra.mxu0 %v356
        %1501 = vmatprep.subr.mxu0 0.0
        %1502 = vmatpush1.msra.mxu0 %v357
        %1503 = vmatprep.subr.mxu0 0.0
        %1504 = vmatpush1.msra.mxu0 %v358
        %1505 = vmatprep.subr.mxu0 0.0
        %1506 = vmatpush1.msra.mxu0 %v359
        %1507 = vmatprep.subr.mxu0 0.0
        %1508 = vmatpush1.msra.mxu0 %v360
        %1509 = vmatprep.subr.mxu0 0.0
        %1510 = vmatpush1.msra.mxu0 %v361
        %1511 = vmatprep.subr.mxu0 0.0
        %1512 = vmatpush1.msra.mxu0 %v362
        %1513 = vmatprep.subr.mxu0 0.0
        %1514 = vmatpush1.msra.mxu0 %v363
        %1515 = vmatprep.subr.mxu0 0.0
        %1516 = vmatpush1.msra.mxu0 %v364
        %1517 = vmatprep.subr.mxu0 0.0
        %1518 = vmatpush1.msra.mxu0 %v365
        %1519 = vmatprep.subr.mxu0 0.0
        %1520 = vmatpush1.msra.mxu0 %v366
        %1521 = vmatprep.subr.mxu0 0.0
        %1522 = vmatpush1.msra.mxu0 %v367
        %1523 = vmatprep.subr.mxu0 0.0
        %1524 = vmatpush1.msra.mxu0 %v368
        %1525 = vmatprep.subr.mxu0 0.0
        %1526 = vmatpush1.msra.mxu0 0.0
        %1527 = vmatprep.subr.mxu0 0.0
        %1528 = vmatpush1.msra.mxu0 0.0
        %1529 = vmatprep.subr.mxu0 0.0
        %1530 = vmatpush1.msra.mxu0 0.0
        %1531 = vmatprep.subr.mxu0 0.0
        %1532 = vmatpush1.msra.mxu0 0.0
        %1533 = vmatprep.subr.mxu0 0.0
        %1534 = vmatpush1.msra.mxu0 0.0
        %1535 = vmatprep.subr.mxu0 0.0
        %1536 = vmatpush1.msra.mxu0 0.0
        %1537 = vmatprep.subr.mxu0 0.0
        %1538 = vmatpush1.msra.mxu0 0.0
        %1539 = vmatprep.subr.mxu0 0.0
        %1540 = vmatpush1.msra.mxu0 0.0
        %1541 = vmatprep.subr.mxu0 0.0
        %1542 = vmatpush1.msra.mxu0 0.0
        %1543 = vmatprep.subr.mxu0 0.0
        %1544 = vmatpush1.msra.mxu0 0.0
        %1545 = vmatprep.subr.mxu0 0.0
        %1546 = vmatpush1.msra.mxu0 0.0
        %1547 = vmatprep.subr.mxu0 0.0
        %1548 = vmatpush1.msra.mxu0 0.0
        %1549 = vmatprep.subr.mxu0 0.0
        %1550 = vmatpush1.msra.mxu0 0.0
        %1551 = vmatprep.subr.mxu0 0.0
        %1552 = vmatpush1.msra.mxu0 0.0
        %1553 = vmatprep.subr.mxu0 0.0
        %1554 = vmatpush1.msra.mxu0 0.0
        %1555 = vmatprep.subr.mxu0 0.0
        %1556 = vmatpush1.msra.mxu0 0.0
        %1557 = vmatprep.mubr.f32.mxu0 0.0
        %1558 = vmatmul.mubr.f32.gmra.mrb[0].mxu0 %v1480
        %v1559 = vpop.f32.mrb[0].mxu0
        %v1560 = vadd.f32 %v1491, %v1559
        %v1561 = vpop.f32.mrb[0].mxu0
        %1562 = vdwg.mxu0
        %v1563 = vtanh.pop %v1560
        %1564 = vmatprep.subr.mxu0 0.0
        %1565 = vmatpush1.msra.mxu0 %v369
        %1566 = vmatprep.subr.mxu0 0.0
        %1567 = vmatpush1.msra.mxu0 %v370
        %1568 = vmatprep.subr.mxu0 0.0
        %1569 = vmatpush1.msra.mxu0 %v371
        %1570 = vmatprep.subr.mxu0 0.0
        %1571 = vmatpush1.msra.mxu0 %v372
        %1572 = vmatprep.subr.mxu0 0.0
        %1573 = vmatpush1.msra.mxu0 %v373
        %1574 = vmatprep.subr.mxu0 0.0
        %1575 = vmatpush1.msra.mxu0 %v374
        %1576 = vmatprep.subr.mxu0 0.0
        %1577 = vmatpush1.msra.mxu0 %v375
        %1578 = vmatprep.subr.mxu0 0.0
        %1579 = vmatpush1.msra.mxu0 %v376
        %1580 = vmatprep.subr.mxu0 0.0
        %1581 = vmatpush1.msra.mxu0 %v377
        %1582 = vmatprep.subr.mxu0 0.0
        %1583 = vmatpush1.msra.mxu0 %v378
        %1584 = vmatprep.subr.mxu0 0.0
        %1585 = vmatpush1.msra.mxu0 %v379
        %1586 = vmatprep.subr.mxu0 0.0
        %1587 = vmatpush1.msra.mxu0 %v380
        %1588 = vmatprep.subr.mxu0 0.0
        %1589 = vmatpush1.msra.mxu0 %v381
        %1590 = vmatprep.subr.mxu0 0.0
        %1591 = vmatpush1.msra.mxu0 %v382
        %1592 = vmatprep.subr.mxu0 0.0
        %1593 = vmatpush1.msra.mxu0 %v383
        %1594 = vmatprep.subr.mxu0 0.0
        %1595 = vmatpush1.msra.mxu0 %v384
        %1596 = vmatprep.subr.mxu0 0.0
        %1597 = vmatpush1.msra.mxu0 0.0
        %1598 = vmatprep.subr.mxu0 0.0
        %1599 = vmatpush1.msra.mxu0 0.0
        %1600 = vmatprep.subr.mxu0 0.0
        %1601 = vmatpush1.msra.mxu0 0.0
        %1602 = vmatprep.subr.mxu0 0.0
        %1603 = vmatpush1.msra.mxu0 0.0
        %1604 = vmatprep.subr.mxu0 0.0
        %1605 = vmatpush1.msra.mxu0 0.0
        %1606 = vmatprep.subr.mxu0 0.0
        %1607 = vmatpush1.msra.mxu0 0.0
        %1608 = vmatprep.subr.mxu0 0.0
        %1609 = vmatpush1.msra.mxu0 0.0
        %1610 = vmatprep.subr.mxu0 0.0
        %1611 = vmatpush1.msra.mxu0 0.0
        %1612 = vmatprep.subr.mxu0 0.0
        %1613 = vmatpush1.msra.mxu0 0.0
        %1614 = vmatprep.subr.mxu0 0.0
        %1615 = vmatpush1.msra.mxu0 0.0
        %1616 = vmatprep.subr.mxu0 0.0
        %1617 = vmatpush1.msra.mxu0 0.0
        %1618 = vmatprep.subr.mxu0 0.0
        %1619 = vmatpush1.msra.mxu0 0.0
        %1620 = vmatprep.subr.mxu0 0.0
        %1621 = vmatpush1.msra.mxu0 0.0
        %1622 = vmatprep.subr.mxu0 0.0
        %1623 = vmatpush1.msra.mxu0 0.0
        %1624 = vmatprep.subr.mxu0 0.0
        %1625 = vmatpush1.msra.mxu0 0.0
        %1626 = vmatprep.subr.mxu0 0.0
        %1627 = vmatpush1.msra.mxu0 0.0
        %1628 = vmatprep.mubr.f32.mxu0 0.0
        %1629 = vmatmul.mubr.f32.gmra.mrb[0].mxu0 %v1563
        %v1630 = vpop.f32.mrb[0].mxu0
        %v1631 = vadd.f32 %v390, %v1630
        %v1632 = vpop.f32.mrb[0].mxu0
        %1633 = vdwg.mxu0
        %v1634 = vstv %s1484
        %v1635 = vmul.f32 %v1634, %v1631
        %v1636 = vadd.f32 %v1480, %v1635
        %s1637 = scalar_lea.vmem %s344, 56 [#allocation13]
        %1638 = vst [vmem:[%s1637] sm:$0xff] %v1636
        %1639 = vst [vmem:[#allocation2] sm:$0xff] %v1636
        %s1640 = sand.u32 %s184, 1
        %s1641 = scalar_lea.sflag [#allocation5], %s1640
        %s1642 = sand.u32 %s184, 1
        %s1643 = smul.addr %s1642, 64
        %s1644 = scalar_lea.vmem [#allocation13], %s1643
        // Predicated region
        $region69: #{tpu_custom_call.1} parent=43 // pred_check
          %p1645 = pneg %p194
        $region70: #{tpu_custom_call.1} parent=43 // pred_check_branch
          %1647 = sbr.rel (%p1645) target = $region72
        $region71: #{tpu_custom_call.1} parent=43 // pred_region
          %s1648 = smul.u32 8, %s31
          %s1650 = ssub.s32 1024, 1024
          %1651 = vsyncadd %s1641, %s1650
          %s1652 = sadd.s32 %s30, %s1648
          %s1653 = smul.addr %s1652, 128
          %s1654 = scalar_lea.hbm %s6, %s1653
          %s1655 = sshll.u32 %s1644, 4
          %s1656 = int_to_ptr.vmem [resolvable:$true] %s1655
          %1661 = dma.vmem_to_hbm [thread:$0]  %s1656, 1024, %s1654, %s1641, 128, 128, 8
        $region72: #{tpu_custom_call.1} parent=43 // pred_fallthru
          _
      $region44: #{tpu_custom_call.1} parent=5 // pred_fallthru
        _
      %p1662 = scmp.le.s32.totalorder 2, %s21
      // Predicated region
      $region73: #{tpu_custom_call.1} parent=5 // pred_check
        %p1663 = pneg %p1662
      $region74: #{tpu_custom_call.1} parent=5 // pred_check_branch
        %1665 = sbr.rel (%p1663) target = $region76
      $region75: #{tpu_custom_call.1} parent=5 // pred_region
        %s1666 = ssub.s32 %s21, 2
        // Predicated region
        $region77: #{tpu_custom_call.1} parent=75 // pred_check
          %p1667 = pneg %p200
        $region78: #{tpu_custom_call.1} parent=75 // pred_check_branch
          %1669 = sbr.rel (%p1667) target = $region80
        $region79: #{tpu_custom_call.1} parent=75 // pred_region
          %s1670 = sand.u32 %s185, 1
          %s1671 = scalar_lea.sflag [#allocation5], %s1670
          %s1672 = sand.u32 %s185, 1
          %s1673 = smul.addr %s1672, 64
          %s1674 = scalar_lea.vmem [#allocation13], %s1673
          %1675 = dma.done %s1671, 1024
        $region80: #{tpu_custom_call.1} parent=75 // pred_fallthru
          _
      $region76: #{tpu_custom_call.1} parent=5 // pred_fallthru
        _
    $region6: #{tpu_custom_call.1} parent=1 // loop_footer
      %s25 = sadd.s32 1, %s21
    $region7: #{tpu_custom_call.1} parent=1 // loop_footer_branch
      %20 = sbr.rel target = $region3
    $region8: #{tpu_custom_call.1} parent=1 // loop_exit
      _
    %1676 = vsyncpa [#allocation4], 1
    %s1677 = scalar_lea.sflag [#allocation4], 1
    %1678 = vsyncpa %s1677, 1
    %1679 = vsyncpa [#allocation9], 1
    %s1680 = scalar_lea.sflag [#allocation9], 1
    %1681 = vsyncpa %s1680, 1
    %1682 = vsyncpa [#allocation12], 1
    %1683 = vsyncpa [#allocation5], 1
    %s1684 = scalar_lea.sflag [#allocation5], 1
    %1685 = vsyncpa %s1684, 1
    %1686 = vsyncpa [#allocation6], 1
    %s1687 = scalar_lea.sflag [#allocation6], 1
    %1688 = vsyncpa %s1687, 1

</llo_original>
